<compile_context>
chip_gen: v6e
topology: v6e:2x2x1
jax: 0.10.0
libtpu: 0.0.40
codegen_flags: <defaults>
</compile_context>

<pallas_src>
import jax
import jax.numpy as jnp
from jax.experimental import pallas as pl
from jax.experimental.pallas import tpu as pltpu


def _round_up(x, m):
    return (x + m - 1) // m * m


def _round_down(x, m):
    return x // m * m


def _cdiv(a, b):
    return -(-a // b)


def _make_sage_kernel(deg_lane):
    """deg_lane: lane index (in the padded feature axis) holding the all-ones
    source column, i.e. where the in-degree accumulates."""

    def kernel(adj_ref, x_src_ref, x_dst_ref, w_self_ref, w_neigh_ref, b_ref,
               out_ref, acc_ref):
        k = pl.program_id(1)

        @pl.when(k == 0)
        def _init():
            acc_ref[...] = jnp.zeros_like(acc_ref)

        # Neighbor-sum accumulation: bf16 x bf16 -> f32 single-pass MXU matmul
        # (no per-tile upcast of the O(N^2) adjacency operand).  The constant-1
        # source lane makes acc[:, deg_lane] the running in-degree.
        acc_ref[...] += jnp.dot(adj_ref[...], x_src_ref[...],
                                preferred_element_type=jnp.float32)

        @pl.when(k == pl.num_programs(1) - 1)
        def _finalize():
            acc = acc_ref[...]
            deg = acc[:, deg_lane:deg_lane + 1]            # (tm, 1), exact ints
            # DGL mean-reduce yields 0 for zero-in-degree nodes -> guard with 1.
            # Exact divide: runs once per destination-row tile, so it is free
            # relative to the k-loop (avoids the ~2^-12 approx-reciprocal error).
            h_n = acc / jnp.maximum(deg, 1.0)

            # Fused "concat + Linear": [x, h_N] @ W.T + b
            #   == x @ W_self + h_N @ W_neigh + b.
            # Correctness of the fused degree lane relies on W_self/W_neigh rows
            # >= in_feat (including the degree-lane row) being zero-padded --
            # pack_weights guarantees this.
            out = (jnp.dot(x_dst_ref[...], w_self_ref[...],
                           preferred_element_type=jnp.float32)
                   + jnp.dot(h_n, w_neigh_ref[...],
                             preferred_element_type=jnp.float32)
                   + b_ref[...])
            out_ref[...] = out.astype(out_ref.dtype)

    return kernel


def plan_tiles(n, in_feat, out_feat, *, tm=512, tk=1024):
    """Pick destination-row / source-node tile sizes and a VMEM limit.

    Generation-aware: the budget is derived from the local TPU's physical VMEM
    (v5e/v6e: 128 MiB, v7x: 64 MiB per TensorCore) with >= 25% headroom for
    compiler scratch; tiles are shrunk until the double-buffered working set
    fits.  tm is also kept small enough that the "parallel" row axis has >= 2
    blocks (v7x megacore) when the graph allows it.
    """
    f_pad = _round_up(in_feat + 1, 128)
    out_pad = _round_up(out_feat, 128)

    tm = max(8, min(_round_down(tm, 8), _round_up(n, 8)))
    tk = max(128, min(_round_down(tk, 128), _round_up(n, 128)))

    if n > 8 and _cdiv(n, tm) < 2:
        tm = _round_up(_cdiv(n, 2), 8)

    try:
        phys = pltpu.get_tpu_info().vmem_capacity_bytes
    except Exception:
        phys = 64 * 1024 * 1024          # assume the smallest (v7x) if unknown
    budget = max(min(int(phys * 0.75), phys - (16 << 20)), 32 << 20)

    def vmem_bytes(tm_, tk_):
        return (2 * tm_ * tk_ * 2              # adj tiles (bf16, double-buffered)
                + 2 * tk_ * f_pad * 2          # x_src tiles (bf16, double-buffered)
                + 2 * tm_ * f_pad * 4          # x_dst tiles (f32)
                + 2 * 2 * f_pad * out_pad * 4  # W_self / W_neigh
                + 2 * out_pad * 4              # bias
                + 2 * tm_ * out_pad * 4        # output tiles
                + tm_ * f_pad * 4)             # f32 accumulator scratch

    while vmem_bytes(tm, tk) > budget:
        if tk > 128 and tk >= tm:
            tk = max(128, _round_down(tk // 2, 128))
        elif tm > 8:
            tm = max(8, _round_down(tm // 2, 8))
        else:
            break

    vmem_limit = int(min(budget, max(vmem_bytes(tm, tk) + (8 << 20), 32 << 20)))
    return tm, tk, vmem_limit


def pack_weights(weight, bias, in_feat):
    """Split/transpose the (out_feat, 2*in_feat) Linear weight into lane-dense,
    zero-padded W_self / W_neigh / bias operands.  Rows >= in_feat (including
    the degree-lane row) MUST stay zero: the fused degree-lane trick relies on
    it.  Cacheable across forward passes."""
    out_feat, two_f = weight.shape
    assert two_f == 2 * in_feat
    f_pad = _round_up(in_feat + 1, 128)
    out_pad = _round_up(out_feat, 128)
    w_t = weight.astype(jnp.float32).T                      # (2F, out_feat)
    w_self = jnp.zeros((f_pad, out_pad), jnp.float32).at[:in_feat, :out_feat].set(
        w_t[:in_feat])
    w_neigh = jnp.zeros((f_pad, out_pad), jnp.float32).at[:in_feat, :out_feat].set(
        w_t[in_feat:])
    b = jnp.zeros((1, out_pad), jnp.float32).at[0, :out_feat].set(
        bias.astype(jnp.float32))
    return w_self, w_neigh, b


def pack_adjacency(adj, *, tm, tk):
    """Pad the dense 0/1 adjacency -- rows (destinations) to tm, columns
    (sources) to tk, independently, so there is no lcm blow-up -- and cast to
    bf16 (exact for 0/1).  This is the only O(N^2) repack; cache it across
    forward passes on the same graph."""
    n = adj.shape[0]
    n_dst, n_src = _round_up(n, tm), _round_up(n, tk)
    return jnp.zeros((n_dst, n_src), jnp.bfloat16).at[:n, :n].set(
        adj.astype(jnp.bfloat16))


def pack_features(feat, *, tm, tk):
    """x_src: bf16 source copy (+ constant-1 degree lane), padded to tk rows,
    feeding the adj @ x MXU pass.  x_dst: f32 destination copy, padded to tm
    rows, feeding the self term.  O(N*F) per-call cost only."""
    n, f = feat.shape
    f_pad = _round_up(f + 1, 128)
    n_dst, n_src = _round_up(n, tm), _round_up(n, tk)
    x_src = jnp.zeros((n_src, f_pad), jnp.bfloat16).at[:n, :f].set(
        feat.astype(jnp.bfloat16))
    x_src = x_src.at[:n, f].set(1.0)                        # degree lane
    x_dst = jnp.zeros((n_dst, f_pad), jnp.float32).at[:n, :f].set(
        feat.astype(jnp.float32))
    return x_src, x_dst


def sage_conv_packed(adj_p, x_src, x_dst, w_self, w_neigh, b, *, in_feat, tm, tk,
                     vmem_limit_bytes):
    """Run the kernel on pre-packed operands (padded output is returned)."""
    n_dst, n_src = adj_p.shape
    f_pad, out_pad = w_self.shape
    assert n_dst % tm == 0 and n_src % tk == 0
    grid = (n_dst // tm, n_src // tk)

    cost = pl.CostEstimate(
        flops=2 * n_dst * n_src * f_pad + 4 * n_dst * f_pad * out_pad,
        transcendentals=0,
        bytes_accessed=(n_dst * n_src * 2                       # bf16 adjacency
                        + (n_dst // tm) * n_src * f_pad * 2     # x_src re-streamed
                        + n_dst * f_pad * 4                     # x_dst
                        + 2 * f_pad * out_pad * 4 + out_pad * 4
                        + n_dst * out_pad * 4),
    )

    # TODO(synk): optional follow-ups from the review not applied here --
    # VMEM-resident x_src for huge N/tm ratios and tile-sparsity skipping via
    # scalar prefetch.
    return pl.pallas_call(
        _make_sage_kernel(in_feat),
        out_shape=jax.ShapeDtypeStruct((n_dst, out_pad), jnp.float32),
        grid_spec=pltpu.PrefetchScalarGridSpec(
            num_scalar_prefetch=0,
            grid=grid,
            in_specs=[
                pl.BlockSpec((tm, tk), lambda i, k: (i, k)),          # adj (bf16)
                pl.BlockSpec((tk, f_pad), lambda i, k: (k, 0)),       # x_src (bf16)
                pl.BlockSpec((tm, f_pad), lambda i, k: (i, 0)),       # x_dst (f32)
                pl.BlockSpec((f_pad, out_pad), lambda i, k: (0, 0)),  # W_self
                pl.BlockSpec((f_pad, out_pad), lambda i, k: (0, 0)),  # W_neigh
                pl.BlockSpec((1, out_pad), lambda i, k: (0, 0)),      # bias
            ],
            out_specs=pl.BlockSpec((tm, out_pad), lambda i, k: (i, 0)),
            scratch_shapes=[pltpu.VMEM((tm, f_pad), jnp.float32)],
        ),
        compiler_params=pltpu.CompilerParams(
            dimension_semantics=("parallel", "arbitrary"),
            vmem_limit_bytes=vmem_limit_bytes,
        ),
        cost_estimate=cost,
    )(adj_p, x_src, x_dst, w_self, w_neigh, b)


def sage_conv(adj, feat, weight, bias, *, tm=512, tk=1024):
    """Convenience one-shot SAGEConv forward.

    adj:    (N, N) adjacency, adj[i, j] = 1.0 iff edge j -> i
    feat:   (N, F) node features
    weight: (out_feat, 2F) Linear weight, bias: (out_feat,)
    For repeated forward passes, call pack_adjacency / pack_weights once and
    reuse them with sage_conv_packed (avoids the per-call O(N^2) repack).
    """
    n, f = feat.shape
    out_feat = weight.shape[0]
    tm, tk, vmem_limit = plan_tiles(n, f, out_feat, tm=tm, tk=tk)
    adj_p = pack_adjacency(adj, tm=tm, tk=tk)                # cacheable
    w_self, w_neigh, b = pack_weights(weight, bias, f)       # cacheable
    x_src, x_dst = pack_features(feat, tm=tm, tk=tk)         # per-call, O(N*F)
    out = sage_conv_packed(adj_p, x_src, x_dst, w_self, w_neigh, b,
                           in_feat=f, tm=tm, tk=tk, vmem_limit_bytes=vmem_limit)
    return out[:n, :out_feat].astype(feat.dtype)


def reference(adj, feat, weight, bias):
    adj = adj.astype(jnp.float32)
    feat = feat.astype(jnp.float32)
    deg = jnp.sum(adj, axis=1, keepdims=True)
    h_n = (adj @ feat) / jnp.maximum(deg, 1.0)
    h_total = jnp.concatenate([feat, h_n], axis=1)
    return h_total @ weight.astype(jnp.float32).T + bias.astype(jnp.float32)


if __name__ == "__main__":
    key = jax.random.PRNGKey(0)
    k_adj, k_feat, k_w, k_b = jax.random.split(key, 4)

    N = 384          # auto-tiled to a (2, 1) grid (two "parallel" row blocks)
    IN_FEAT = 16
    OUT_FEAT = 32

    # Deterministic random graph (binary adjacency).
    adj = (jax.random.uniform(k_adj, (N, N)) < 0.10).astype(jnp.float32)
    feat = jax.random.normal(k_feat, (N, IN_FEAT), dtype=jnp.float32)

    # nn.Linear(2*in_feat, out_feat) init: uniform(-1/sqrt(fan_in), 1/sqrt(fan_in))
    fan_in = 2 * IN_FEAT
    bound = 1.0 / (fan_in ** 0.5)
    weight = jax.random.uniform(k_w, (OUT_FEAT, 2 * IN_FEAT),
                                minval=-bound, maxval=bound, dtype=jnp.float32)
    bias = jax.random.uniform(k_b, (OUT_FEAT,),
                              minval=-bound, maxval=bound, dtype=jnp.float32)

    out = jax.block_until_ready(sage_conv(adj, feat, weight, bias))
    ref = reference(adj, feat, weight, bias)
    assert out.shape == (N, OUT_FEAT)
    # Tolerance covers the bf16 source-feature aggregation (the adjacency is
    # exact in bf16, the mean divide is exact, all matmuls accumulate in f32).
    assert jnp.allclose(out, ref, atol=2e-3, rtol=2e-3), "mismatch vs reference"
    print("KERNEL_OK")
</pallas_src>

<mosaic_0001>
module attributes {stable_mosaic.version = 11 : i64} {
  func.func @kernel(%arg0: i32, %arg1: i32, %arg2: memref<192x384xbf16, #tpu.memory_space<vmem>>, %arg3: memref<384x128xbf16, #tpu.memory_space<vmem>>, %arg4: memref<192x128xf32, #tpu.memory_space<vmem>>, %arg5: memref<128x128xf32, #tpu.memory_space<vmem>>, %arg6: memref<128x128xf32, #tpu.memory_space<vmem>>, %arg7: memref<1x128xf32, #tpu.memory_space<vmem>>, %arg8: memref<192x128xf32, #tpu.memory_space<vmem>>, %arg9: memref<192x128xf32, #tpu.memory_space<vmem>>) attributes {dimension_semantics = [#tpu.dimension_semantics<parallel>, #tpu.dimension_semantics<arbitrary>], iteration_bounds = array<i64: 2, 1>, scalar_prefetch = 0 : i64, scratch_operands = 1 : i64, tpu.core_type = #tpu.core_type<tc>, window_params = [{transform_indices = @transform_0, window_bounds = array<i64: 192, 384>}, {transform_indices = @transform_1, window_bounds = array<i64: 384, 128>}, {transform_indices = @transform_2, window_bounds = array<i64: 192, 128>}, {pipeline_mode = #tpu.pipeline_mode<synchronous>, transform_indices = @transform_3, window_bounds = array<i64: 128, 128>}, {pipeline_mode = #tpu.pipeline_mode<synchronous>, transform_indices = @transform_4, window_bounds = array<i64: 128, 128>}, {pipeline_mode = #tpu.pipeline_mode<synchronous>, transform_indices = @transform_5, window_bounds = array<i64: 1, 128>}, {transform_indices = @transform_6, window_bounds = array<i64: 192, 128>}]} {
    %c0_i32 = arith.constant 0 : i32
    %0 = arith.cmpi eq, %arg1, %c0_i32 : i32
    %1 = arith.extui %0 : i1 to i32
    %c0_i32_0 = arith.constant 0 : i32
    %2 = arith.cmpi ne, %1, %c0_i32_0 : i32
    scf.if %2 {
      %cst_10 = arith.constant 0.000000e+00 : f32
      %12 = vector.broadcast %cst_10 : f32 to vector<192x128xf32>
      %c0_11 = arith.constant 0 : index
      %c0_12 = arith.constant 0 : index
      %13 = vector.load %arg9[%c0_11, %c0_12] : memref<192x128xf32, #tpu.memory_space<vmem>>, vector<192x128xf32>
      tpu.vector_store %arg9[%c0_11, %c0_12], %12 {strides = array<i32>} : memref<192x128xf32, #tpu.memory_space<vmem>>, vector<192x128xf32>,
    } else {
    }
    %c0 = arith.constant 0 : index
    %c0_1 = arith.constant 0 : index
    %3 = vector.load %arg9[%c0, %c0_1] : memref<192x128xf32, #tpu.memory_space<vmem>>, vector<192x128xf32>
    %c0_2 = arith.constant 0 : index
    %c0_3 = arith.constant 0 : index
    %4 = vector.load %arg2[%c0_2, %c0_3] : memref<192x384xbf16, #tpu.memory_space<vmem>>, vector<192x384xbf16>
    %c0_4 = arith.constant 0 : index
    %c0_5 = arith.constant 0 : index
    %5 = vector.load %arg3[%c0_4, %c0_5] : memref<384x128xbf16, #tpu.memory_space<vmem>>, vector<384x128xbf16>
    %cst = arith.constant dense<0.000000e+00> : vector<192x128xf32>
    %6 = tpu.matmul %4, %5, %cst {dimension_numbers = #tpu.dot_dimension_numbers<[1], [0], [0], [1], [0, 0, 1, 1], [], []>} : vector<192x384xbf16>, vector<384x128xbf16>, vector<192x128xf32> -> vector<192x128xf32>
    %7 = arith.addf %3, %6 : vector<192x128xf32>
    %c0_6 = arith.constant 0 : index
    %c0_7 = arith.constant 0 : index
    %8 = vector.load %arg9[%c0_6, %c0_7] : memref<192x128xf32, #tpu.memory_space<vmem>>, vector<192x128xf32>
    tpu.vector_store %arg9[%c0_6, %c0_7], %7 {strides = array<i32>} : memref<192x128xf32, #tpu.memory_space<vmem>>, vector<192x128xf32>,
    %c0_i32_8 = arith.constant 0 : i32
    %9 = arith.cmpi eq, %arg1, %c0_i32_8 : i32
    %10 = arith.extui %9 : i1 to i32
    %c0_i32_9 = arith.constant 0 : i32
    %11 = arith.cmpi ne, %10, %c0_i32_9 : i32
    scf.if %11 {
      %c0_10 = arith.constant 0 : index
      %c0_11 = arith.constant 0 : index
      %12 = vector.load %arg9[%c0_10, %c0_11] : memref<192x128xf32, #tpu.memory_space<vmem>>, vector<192x128xf32>
      %13 = vector.extract_strided_slice %12 {offsets = [0, 16], sizes = [192, 1], strides = [1, 1]} : vector<192x128xf32> to vector<192x1xf32>
      %cst_12 = arith.constant 1.000000e+00 : f32
      %14 = vector.broadcast %cst_12 : f32 to vector<192x1xf32>
      %15 = arith.maximumf %13, %14 : vector<192x1xf32>
      %16 = vector.broadcast %15 : vector<192x1xf32> to vector<192x128xf32>
      %17 = arith.divf %12, %16 : vector<192x128xf32>
      %c0_13 = arith.constant 0 : index
      %c0_14 = arith.constant 0 : index
      %18 = vector.load %arg4[%c0_13, %c0_14] : memref<192x128xf32, #tpu.memory_space<vmem>>, vector<192x128xf32>
      %c0_15 = arith.constant 0 : index
      %c0_16 = arith.constant 0 : index
      %19 = vector.load %arg5[%c0_15, %c0_16] : memref<128x128xf32, #tpu.memory_space<vmem>>, vector<128x128xf32>
      %cst_17 = arith.constant dense<0.000000e+00> : vector<192x128xf32>
      %20 = tpu.matmul %18, %19, %cst_17 {dimension_numbers = #tpu.dot_dimension_numbers<[1], [0], [0], [1], [0, 0, 1, 1], [], []>} : vector<192x128xf32>, vector<128x128xf32>, vector<192x128xf32> -> vector<192x128xf32>
      %c0_18 = arith.constant 0 : index
      %c0_19 = arith.constant 0 : index
      %21 = vector.load %arg6[%c0_18, %c0_19] : memref<128x128xf32, #tpu.memory_space<vmem>>, vector<128x128xf32>
      %cst_20 = arith.constant dense<0.000000e+00> : vector<192x128xf32>
      %22 = tpu.matmul %17, %21, %cst_20 {dimension_numbers = #tpu.dot_dimension_numbers<[1], [0], [0], [1], [0, 0, 1, 1], [], []>} : vector<192x128xf32>, vector<128x128xf32>, vector<192x128xf32> -> vector<192x128xf32>
      %23 = arith.addf %20, %22 : vector<192x128xf32>
      %c0_21 = arith.constant 0 : index
      %c0_22 = arith.constant 0 : index
      %24 = vector.load %arg7[%c0_21, %c0_22] : memref<1x128xf32, #tpu.memory_space<vmem>>, vector<1x128xf32>
      %25 = vector.broadcast %24 : vector<1x128xf32> to vector<192x128xf32>
      %26 = arith.addf %23, %25 : vector<192x128xf32>
      %c0_23 = arith.constant 0 : index
      %c0_24 = arith.constant 0 : index
      %27 = vector.load %arg8[%c0_23, %c0_24] : memref<192x128xf32, #tpu.memory_space<vmem>>, vector<192x128xf32>
      tpu.vector_store %arg8[%c0_23, %c0_24], %26 {strides = array<i32>} : memref<192x128xf32, #tpu.memory_space<vmem>>, vector<192x128xf32>,
    } else {
    }
    return
  }
  func.func @transform_0(%arg0: i32, %arg1: i32) -> (i32, i32) {
    %c0_i32 = arith.constant 0 : i32
    return %arg0, %arg1 : i32, i32
  }
  func.func @transform_1(%arg0: i32, %arg1: i32) -> (i32, i32) {
    %c0_i32 = arith.constant 0 : i32
    %c0_i32_0 = arith.constant 0 : i32
    return %arg1, %c0_i32 : i32, i32
  }
  func.func @transform_2(%arg0: i32, %arg1: i32) -> (i32, i32) {
    %c0_i32 = arith.constant 0 : i32
    %c0_i32_0 = arith.constant 0 : i32
    return %arg0, %c0_i32 : i32, i32
  }
  func.func @transform_3(%arg0: i32, %arg1: i32) -> (i32, i32) {
    %c0_i32 = arith.constant 0 : i32
    %c0_i32_0 = arith.constant 0 : i32
    %c0_i32_1 = arith.constant 0 : i32
    return %c0_i32, %c0_i32_0 : i32, i32
  }
  func.func @transform_4(%arg0: i32, %arg1: i32) -> (i32, i32) {
    %c0_i32 = arith.constant 0 : i32
    %c0_i32_0 = arith.constant 0 : i32
    %c0_i32_1 = arith.constant 0 : i32
    return %c0_i32, %c0_i32_0 : i32, i32
  }
  func.func @transform_5(%arg0: i32, %arg1: i32) -> (i32, i32) {
    %c0_i32 = arith.constant 0 : i32
    %c0_i32_0 = arith.constant 0 : i32
    %c0_i32_1 = arith.constant 0 : i32
    return %c0_i32, %c0_i32_0 : i32, i32
  }
  func.func @transform_6(%arg0: i32, %arg1: i32) -> (i32, i32) {
    %c0_i32 = arith.constant 0 : i32
    %c0_i32_0 = arith.constant 0 : i32
    return %arg0, %c0_i32 : i32, i32
  }
}

</mosaic_0001>

<llo_original>
// kernel: tpu_custom_call.1
$region0: #{tpu_custom_call.1}
  #allocation0 [shape = 'u32[]', space=smem, size = 0x4, offset = 0x4, fixed_abs, tag = 'smem constant byte address 0x4 - core index']
  #allocation1 [shape = 'u32[144,128]{1,0:T(1,128)}', space=vmem, size = 0x12000, scoped, tag = 'internal scratch']
  #allocation2 [shape = 'f32[192,128]{1,0:T(8,128)}', space=vmem, size = 0x18000, scoped, tag = 'scratch operand']
  %s0 = inlined_call_operand.hbm [shape: bf16[384,384], index: 0, kind: input, shape index: {}]
  %s1 = inlined_call_operand.hbm [shape: bf16[384,128], index: 1, kind: input, shape index: {}]
  %s2 = inlined_call_operand.hbm [shape: f32[384,128], index: 2, kind: input, shape index: {}]
  %s3 = inlined_call_operand.hbm [shape: f32[128,128], index: 3, kind: input, shape index: {}]
  %s4 = inlined_call_operand.hbm [shape: f32[128,128], index: 4, kind: input, shape index: {}]
  %s5 = inlined_call_operand.vmem [shape: f32[1,128], index: 5, kind: input, shape index: {}]
  %s6 = inlined_call_operand.hbm [shape: f32[384,128], index: 6, kind: output, shape index: {}]
  %s7 = sld [smem:[#allocation0]]
  $region85: #{tpu_custom_call.1} parent=0
    _
  %s9 = ssub.s32 1, %s7
  %s10 = scalar_select 0, %s9, %s7
  $region1: #{tpu_custom_call.1} parent=0
    #allocation3 [shape = 'u8[294912]{0}', space=vmem, size = 0x48000, scoped, tag = 'input window, operand 0']
    #allocation4 [shape = 's32[2]{0}', space=sflag, size = 0x8, scoped, tag = 'scoped memory for tpu_custom_call.1']
    #allocation5 [shape = 's32[2]{0}', space=sflag, size = 0x8, scoped, tag = 'scoped memory for tpu_custom_call.1']
    #allocation6 [shape = 'u8[98304]{0}', space=vmem, size = 0x18000, scoped, tag = 'input window, operand 1, single buffered']
    #allocation7 [shape = 's32[1]{0}', space=sflag, size = 0x4, scoped, tag = 'scoped memory for tpu_custom_call.1']
    #allocation8 [shape = 'u8[196608]{0}', space=vmem, size = 0x30000, scoped, tag = 'input window, operand 2']
    #allocation9 [shape = 'u8[65536]{0}', space=vmem, size = 0x10000, scoped, tag = 'input window, operand 3, single buffered']
    #allocation10 [shape = 'u8[65536]{0}', space=vmem, size = 0x10000, scoped, tag = 'input window, operand 4, single buffered']
    #allocation11 [shape = 's32[1]{0}', space=sflag, size = 0x4, scoped, tag = 'scoped memory for tpu_custom_call.1']
    #allocation12 [shape = 'u8[196608]{0}', space=vmem, size = 0x30000, scoped, tag = 'output window, operand 0']
    %11 = vsyncpa [#allocation4], 0
    %s12 = scalar_lea.sflag [#allocation4], 1
    %13 = vsyncpa %s12, 0
    %14 = vsyncpa [#allocation7], 0
    %15 = vsyncpa [#allocation11], 0
    %16 = vsyncpa [#allocation5], 0
    %s17 = scalar_lea.sflag [#allocation5], 1
    %18 = vsyncpa %s17, 0
    loop: start=0, step=1, limit=4
    $region2: #{tpu_custom_call.1} parent=1 // loop_pre_header
      _
    $region3: #{tpu_custom_call.1} parent=1 // loop_header
      %s20 = sphi 0, %s24
      %p21 = scmp.ge.s32.totalorder %s20, 4
      %s27 = sphi 0, %s39
      %s28 = sphi 0, %s35
      %s29 = sphi 0, %s27
      %s30 = sphi 0, %s28
      %s31 = sphi 0, %s29
      %s32 = sphi 0, %s30
      %s44 = sphi 0, %s46
      %s47 = sphi 0, %s44
      %s48 = sphi 0, %s47
      %s64 = sphi 0, %s48
      %s70 = sphi 0, %s72
      %s73 = sphi 0, %s70
      %s74 = sphi 0, %s73
      %s90 = sphi 0, %s74
      %s96 = sphi 0, %s98
      %s99 = sphi 0, %s96
      %s100 = sphi 0, %s99
      %s116 = sphi 0, %s100
      %s120 = sphi 0, %s120
      %s122 = sphi 0, %s120
      %s123 = sphi 0, %s122
      %s137 = sphi 0, %s123
      %s141 = sphi 0, %s141
      %s143 = sphi 0, %s141
      %s144 = sphi 0, %s143
      %s158 = sphi 0, %s144
      %s162 = sphi 0, %s162
      %s164 = sphi 0, %s162
      %s165 = sphi 0, %s164
      %s179 = sphi 0, %s165
      %s185 = sphi 0, %s187
      %s188 = sphi 0, %s185
      %s189 = sphi 0, %s188
      %s205 = sphi 0, %s189
    $region4: #{tpu_custom_call.1} parent=1 // loop_header_branch
      %23 = sbr.rel (%p21) target = $region8
    $region5: #{tpu_custom_call.1} parent=1 // loop_body
      %s25 = ssub.s32 %s20, 1
      %s26 = ssub.s32 %s20, 2
      %s33 = sadd.s32 1, %s28
      %p34 = scmp.ge.s32.totalorder %s33, 1
      %s35 = scalar_select %p34, 0, %s33
      %s36 = sadd.s32 1, %s27
      %s37 = scalar_select %p34, %s36, %s27
      %p38 = scmp.ge.s32.totalorder %s37, 2
      %s39 = scalar_select %p38, 0, %s37
      %s40 = ssub.s32 %s27, %s39
      %s41 = ssub.s32 %s28, %s35
      %s42 = sor.u32 %s40, %s41
      %p43 = scmp.eq.s32.totalorder %s42, 0
      %s45 = sadd.s32 %s44, 1
      %s46 = scalar_select %p43, %s44, %s45
      %p49 = pneg %p43
      %p50 = scmp.eq.s32.totalorder %s20, 1
      %p51 = por %p49, %p50
      %p52 = scmp.ne.s32.totalorder %s44, %s47
      %p53 = scmp.eq.s32.totalorder %s20, 0
      %p54 = por %p52, %p53
      %p55 = scmp.ne.s32.totalorder %s44, %s47
      %p56 = scmp.eq.s32.totalorder %s25, 1
      %p57 = por %p55, %p56
      %p58 = scmp.ne.s32.totalorder %s47, %s48
      %p59 = scmp.eq.s32.totalorder %s25, 0
      %p60 = por %p58, %p59
      %p61 = scmp.ne.s32.totalorder %s47, %s48
      %p62 = scmp.eq.s32.totalorder %s26, 1
      %p63 = por %p61, %p62
      %p65 = scmp.ne.s32.totalorder %s48, %s64
      %p66 = scmp.eq.s32.totalorder %s26, 0
      %p67 = por %p65, %p66
      %s68 = ssub.s32 %s28, %s35
      %p69 = scmp.eq.s32.totalorder %s68, 0
      %s71 = sadd.s32 %s70, 1
      %s72 = scalar_select %p69, %s70, %s71
      %p75 = pneg %p69
      %p76 = scmp.eq.s32.totalorder %s20, 1
      %p77 = por %p75, %p76
      %p78 = scmp.ne.s32.totalorder %s70, %s73
      %p79 = scmp.eq.s32.totalorder %s20, 0
      %p80 = por %p78, %p79
      %p81 = scmp.ne.s32.totalorder %s70, %s73
      %p82 = scmp.eq.s32.totalorder %s25, 1
      %p83 = por %p81, %p82
      %p84 = scmp.ne.s32.totalorder %s73, %s74
      %p85 = scmp.eq.s32.totalorder %s25, 0
      %p86 = por %p84, %p85
      %p87 = scmp.ne.s32.totalorder %s73, %s74
      %p88 = scmp.eq.s32.totalorder %s26, 1
      %p89 = por %p87, %p88
      %p91 = scmp.ne.s32.totalorder %s74, %s90
      %p92 = scmp.eq.s32.totalorder %s26, 0
      %p93 = por %p91, %p92
      %s94 = ssub.s32 %s27, %s39
      %p95 = scmp.eq.s32.totalorder %s94, 0
      %s97 = sadd.s32 %s96, 1
      %s98 = scalar_select %p95, %s96, %s97
      %p101 = pneg %p95
      %p102 = scmp.eq.s32.totalorder %s20, 1
      %p103 = por %p101, %p102
      %p104 = scmp.ne.s32.totalorder %s96, %s99
      %p105 = scmp.eq.s32.totalorder %s20, 0
      %p106 = por %p104, %p105
      %p107 = scmp.ne.s32.totalorder %s96, %s99
      %p108 = scmp.eq.s32.totalorder %s25, 1
      %p109 = por %p107, %p108
      %p110 = scmp.ne.s32.totalorder %s99, %s100
      %p111 = scmp.eq.s32.totalorder %s25, 0
      %p112 = por %p110, %p111
      %p113 = scmp.ne.s32.totalorder %s99, %s100
      %p114 = scmp.eq.s32.totalorder %s26, 1
      %p115 = por %p113, %p114
      %p117 = scmp.ne.s32.totalorder %s100, %s116
      %p118 = scmp.eq.s32.totalorder %s26, 0
      %p119 = por %p117, %p118
      %s121 = sadd.s32 %s120, 1
      %p124 = scmp.eq.s32.totalorder %s20, 1
      %p125 = scmp.ne.s32.totalorder %s120, %s122
      %p126 = scmp.eq.s32.totalorder %s20, 0
      %p127 = por %p125, %p126
      %p128 = scmp.ne.s32.totalorder %s120, %s122
      %p129 = scmp.eq.s32.totalorder %s25, 1
      %p130 = por %p128, %p129
      %p131 = scmp.ne.s32.totalorder %s122, %s123
      %p132 = scmp.eq.s32.totalorder %s25, 0
      %p133 = por %p131, %p132
      %p134 = scmp.ne.s32.totalorder %s122, %s123
      %p135 = scmp.eq.s32.totalorder %s26, 1
      %p136 = por %p134, %p135
      %p138 = scmp.ne.s32.totalorder %s123, %s137
      %p139 = scmp.eq.s32.totalorder %s26, 0
      %p140 = por %p138, %p139
      %s142 = sadd.s32 %s141, 1
      %p145 = scmp.eq.s32.totalorder %s20, 1
      %p146 = scmp.ne.s32.totalorder %s141, %s143
      %p147 = scmp.eq.s32.totalorder %s20, 0
      %p148 = por %p146, %p147
      %p149 = scmp.ne.s32.totalorder %s141, %s143
      %p150 = scmp.eq.s32.totalorder %s25, 1
      %p151 = por %p149, %p150
      %p152 = scmp.ne.s32.totalorder %s143, %s144
      %p153 = scmp.eq.s32.totalorder %s25, 0
      %p154 = por %p152, %p153
      %p155 = scmp.ne.s32.totalorder %s143, %s144
      %p156 = scmp.eq.s32.totalorder %s26, 1
      %p157 = por %p155, %p156
      %p159 = scmp.ne.s32.totalorder %s144, %s158
      %p160 = scmp.eq.s32.totalorder %s26, 0
      %p161 = por %p159, %p160
      %s163 = sadd.s32 %s162, 1
      %p166 = scmp.eq.s32.totalorder %s20, 1
      %p167 = scmp.ne.s32.totalorder %s162, %s164
      %p168 = scmp.eq.s32.totalorder %s20, 0
      %p169 = por %p167, %p168
      %p170 = scmp.ne.s32.totalorder %s162, %s164
      %p171 = scmp.eq.s32.totalorder %s25, 1
      %p172 = por %p170, %p171
      %p173 = scmp.ne.s32.totalorder %s164, %s165
      %p174 = scmp.eq.s32.totalorder %s25, 0
      %p175 = por %p173, %p174
      %p176 = scmp.ne.s32.totalorder %s164, %s165
      %p177 = scmp.eq.s32.totalorder %s26, 1
      %p178 = por %p176, %p177
      %p180 = scmp.ne.s32.totalorder %s165, %s179
      %p181 = scmp.eq.s32.totalorder %s26, 0
      %p182 = por %p180, %p181
      %s183 = ssub.s32 %s27, %s39
      %p184 = scmp.eq.s32.totalorder %s183, 0
      %s186 = sadd.s32 %s185, 1
      %s187 = scalar_select %p184, %s185, %s186
      %p190 = pneg %p184
      %p191 = scmp.eq.s32.totalorder %s20, 1
      %p192 = por %p190, %p191
      %p193 = scmp.ne.s32.totalorder %s185, %s188
      %p194 = scmp.eq.s32.totalorder %s20, 0
      %p195 = por %p193, %p194
      %p196 = scmp.ne.s32.totalorder %s185, %s188
      %p197 = scmp.eq.s32.totalorder %s25, 1
      %p198 = por %p196, %p197
      %p199 = scmp.ne.s32.totalorder %s188, %s189
      %p200 = scmp.eq.s32.totalorder %s25, 0
      %p201 = por %p199, %p200
      %p202 = scmp.ne.s32.totalorder %s188, %s189
      %p203 = scmp.eq.s32.totalorder %s26, 1
      %p204 = por %p202, %p203
      %p206 = scmp.ne.s32.totalorder %s189, %s205
      %p207 = scmp.eq.s32.totalorder %s26, 0
      %p208 = por %p206, %p207
      %p209 = scmp.le.s32.totalorder 1, %s20
      %p210 = scmp.lt.s32.totalorder %s20, 3
      %p211 = pnand %p209, %p210
      %p212 = pneg %p211
      // Predicated region
      $region9: #{tpu_custom_call.1} parent=5 // pred_check
        _
      $region10: #{tpu_custom_call.1} parent=5 // pred_check_branch
        %214 = sbr.rel (%p211) target = $region12
      $region11: #{tpu_custom_call.1} parent=5 // pred_region
        %s215 = ssub.s32 %s20, 1
        // Predicated region
        $region13: #{tpu_custom_call.1} parent=11 // pred_check
          %p216 = pneg %p86
        $region14: #{tpu_custom_call.1} parent=11 // pred_check_branch
          %218 = sbr.rel (%p216) target = $region16
        $region15: #{tpu_custom_call.1} parent=11 // pred_region
          %s219 = smul.u32 48, %s30
          %s221 = ssub.s32 3072, 3072
          %222 = vsyncadd [#allocation7], %s221
          %s223 = smul.addr %s219, 64
          %s224 = scalar_lea.hbm %s1, %s223
          %s225 = sshll.u32 [#allocation6], 4
          %s226 = int_to_ptr.vmem [resolvable:$true] %s225
          %231 = dma.hbm_to_vmem [thread:$0]  %s224, 3072, %s226, [#allocation7], 64, 64, 4
        $region16: #{tpu_custom_call.1} parent=11 // pred_fallthru
          _
        // Predicated region
        $region17: #{tpu_custom_call.1} parent=11 // pred_check
          %p232 = pneg %p133
        $region18: #{tpu_custom_call.1} parent=11 // pred_check_branch
          %234 = sbr.rel (%p232) target = $region20
        $region19: #{tpu_custom_call.1} parent=11 // pred_region
          %s236 = ssub.s32 2048, 2048
          %237 = vsyncadd [#allocation7], %s236
          %s238 = sshll.u32 [#allocation9], 4
          %s239 = int_to_ptr.vmem [resolvable:$true] %s238
          %244 = dma.hbm_to_vmem [thread:$0]  %s3, 2048, %s239, [#allocation7], 128, 128, 8
        $region20: #{tpu_custom_call.1} parent=11 // pred_fallthru
          _
        // Predicated region
        $region21: #{tpu_custom_call.1} parent=11 // pred_check
          %p245 = pneg %p154
        $region22: #{tpu_custom_call.1} parent=11 // pred_check_branch
          %247 = sbr.rel (%p245) target = $region24
        $region23: #{tpu_custom_call.1} parent=11 // pred_region
          %s249 = ssub.s32 2048, 2048
          %250 = vsyncadd [#allocation11], %s249
          %s251 = sshll.u32 [#allocation10], 4
          %s252 = int_to_ptr.vmem [resolvable:$true] %s251
          %257 = dma.hbm_to_vmem [thread:$0]  %s4, 2048, %s252, [#allocation11], 128, 128, 8
        $region24: #{tpu_custom_call.1} parent=11 // pred_fallthru
          _
        // Predicated region
        $region25: #{tpu_custom_call.1} parent=11 // pred_check
          %p258 = pneg %p175
        $region26: #{tpu_custom_call.1} parent=11 // pred_check_branch
          %260 = sbr.rel (%p258) target = $region28
        $region27: #{tpu_custom_call.1} parent=11 // pred_region
          _
        $region28: #{tpu_custom_call.1} parent=11 // pred_fallthru
          _
      $region12: #{tpu_custom_call.1} parent=5 // pred_fallthru
        _
      %p261 = scmp.lt.s32.totalorder %s20, 2
      // Predicated region
      $region29: #{tpu_custom_call.1} parent=5 // pred_check
        %p262 = pneg %p261
      $region30: #{tpu_custom_call.1} parent=5 // pred_check_branch
        %264 = sbr.rel (%p262) target = $region32
      $region31: #{tpu_custom_call.1} parent=5 // pred_region
        // Predicated region
        $region33: #{tpu_custom_call.1} parent=31 // pred_check
          %p265 = pneg %p54
        $region34: #{tpu_custom_call.1} parent=31 // pred_check_branch
          %267 = sbr.rel (%p265) target = $region36
        $region35: #{tpu_custom_call.1} parent=31 // pred_region
          %s268 = sand.u32 %s20, 1
          %s269 = scalar_lea.sflag [#allocation4], %s268
          %s270 = sand.u32 %s44, 1
          %s271 = smul.addr %s270, 288
          %s272 = scalar_lea.vmem [#allocation3], %s271
          %s273 = smul.u32 24, %s27
          %s274 = smul.u32 3, %s28
          %s276 = ssub.s32 4608, 4608
          %277 = vsyncadd %s269, %s276
          %s278 = smul.addr %s273, 3
          %s279 = sadd.s32 %s274, %s278
          %s280 = smul.addr %s279, 64
          %s281 = scalar_lea.hbm %s0, %s280
          %s282 = sshll.u32 %s272, 4
          %s283 = int_to_ptr.vmem [resolvable:$true] %s282
          %288 = dma.hbm_to_vmem [thread:$0]  %s281, 4608, %s283, %s269, 192, 192, 12
        $region36: #{tpu_custom_call.1} parent=31 // pred_fallthru
          _
        // Predicated region
        $region37: #{tpu_custom_call.1} parent=31 // pred_check
          %p289 = pneg %p106
        $region38: #{tpu_custom_call.1} parent=31 // pred_check_branch
          %291 = sbr.rel (%p289) target = $region40
        $region39: #{tpu_custom_call.1} parent=31 // pred_region
          %s292 = sand.u32 %s20, 1
          %s293 = scalar_lea.sflag [#allocation4], %s292
          %s294 = sand.u32 %s96, 1
          %s295 = smul.addr %s294, 192
          %s296 = scalar_lea.vmem [#allocation8], %s295
          %s297 = smul.u32 24, %s27
          %s299 = ssub.s32 3072, 3072
          %300 = vsyncadd %s293, %s299
          %s301 = smul.addr %s297, 128
          %s302 = scalar_lea.hbm %s2, %s301
          %s303 = sshll.u32 %s296, 4
          %s304 = int_to_ptr.vmem [resolvable:$true] %s303
          %309 = dma.hbm_to_vmem [thread:$0]  %s302, 3072, %s304, %s293, 128, 128, 8
        $region40: #{tpu_custom_call.1} parent=31 // pred_fallthru
          _
      $region32: #{tpu_custom_call.1} parent=5 // pred_fallthru
        _
      %p310 = scmp.le.s32.totalorder 1, %s20
      %p311 = scmp.lt.s32.totalorder %s20, 3
      %p312 = pnand %p310, %p311
      %p313 = pneg %p312
      // Predicated region
      $region41: #{tpu_custom_call.1} parent=5 // pred_check
        _
      $region42: #{tpu_custom_call.1} parent=5 // pred_check_branch
        %315 = sbr.rel (%p312) target = $region44
      $region43: #{tpu_custom_call.1} parent=5 // pred_region
        %s316 = ssub.s32 %s20, 1
        %s317 = sand.u32 %s25, 1
        %s318 = scalar_lea.sflag [#allocation4], %s317
        %s319 = sand.u32 %s47, 1
        %s320 = smul.addr %s319, 288
        %s321 = scalar_lea.vmem [#allocation3], %s320
        // Predicated region
        $region45: #{tpu_custom_call.1} parent=43 // pred_check
          %p322 = pneg %p60
        $region46: #{tpu_custom_call.1} parent=43 // pred_check_branch
          %324 = sbr.rel (%p322) target = $region48
        $region47: #{tpu_custom_call.1} parent=43 // pred_region
          %325 = dma.done %s318, 4608
        $region48: #{tpu_custom_call.1} parent=43 // pred_fallthru
          _
        // Predicated region
        $region49: #{tpu_custom_call.1} parent=43 // pred_check
          %p326 = pneg %p86
        $region50: #{tpu_custom_call.1} parent=43 // pred_check_branch
          %328 = sbr.rel (%p326) target = $region52
        $region51: #{tpu_custom_call.1} parent=43 // pred_region
          %329 = dma.done [#allocation7], 3072
        $region52: #{tpu_custom_call.1} parent=43 // pred_fallthru
          _
        %s330 = sand.u32 %s25, 1
        %s331 = scalar_lea.sflag [#allocation4], %s330
        %s332 = sand.u32 %s99, 1
        %s333 = smul.addr %s332, 192
        %s334 = scalar_lea.vmem [#allocation8], %s333
        // Predicated region
        $region53: #{tpu_custom_call.1} parent=43 // pred_check
          %p335 = pneg %p112
        $region54: #{tpu_custom_call.1} parent=43 // pred_check_branch
          %337 = sbr.rel (%p335) target = $region56
        $region55: #{tpu_custom_call.1} parent=43 // pred_region
          %338 = dma.done %s331, 3072
        $region56: #{tpu_custom_call.1} parent=43 // pred_fallthru
          _
        // Predicated region
        $region57: #{tpu_custom_call.1} parent=43 // pred_check
          %p339 = pneg %p133
        $region58: #{tpu_custom_call.1} parent=43 // pred_check_branch
          %341 = sbr.rel (%p339) target = $region60
        $region59: #{tpu_custom_call.1} parent=43 // pred_region
          %342 = dma.done [#allocation7], 2048
        $region60: #{tpu_custom_call.1} parent=43 // pred_fallthru
          _
        // Predicated region
        $region61: #{tpu_custom_call.1} parent=43 // pred_check
          %p343 = pneg %p154
        $region62: #{tpu_custom_call.1} parent=43 // pred_check_branch
          %345 = sbr.rel (%p343) target = $region64
        $region63: #{tpu_custom_call.1} parent=43 // pred_region
          %346 = dma.done [#allocation11], 2048
        $region64: #{tpu_custom_call.1} parent=43 // pred_fallthru
          _
        %s347 = sand.u32 %s25, 1
        %s348 = scalar_lea.sflag [#allocation4], %s347
        %s349 = sand.u32 %s47, 1
        %s350 = smul.addr %s349, 288
        %s351 = scalar_lea.vmem [#allocation3], %s350
        %p352 = pneg %p60
        %p353 = pneg %p57
        %p354 = pneg %p86
        %p355 = pneg %p83
        %s356 = sand.u32 %s25, 1
        %s357 = scalar_lea.sflag [#allocation4], %s356
        %s358 = sand.u32 %s99, 1
        %s359 = smul.addr %s358, 192
        %s360 = scalar_lea.vmem [#allocation8], %s359
        %p361 = pneg %p112
        %p362 = pneg %p109
        %p363 = pneg %p133
        %p364 = pneg %p130
        %p365 = pneg %p154
        %p366 = pneg %p151
        %p367 = pneg %p175
        %p368 = pneg %p172
        %p369 = pneg %p201
        %p370 = pneg %p198
        %s371 = sand.u32 %s188, 1
        %s372 = scalar_lea.sflag [#allocation5], %s371
        %s373 = sand.u32 %s188, 1
        %s374 = smul.addr %s373, 192
        %s375 = scalar_lea.vmem [#allocation12], %s374
        %s376 = smul.u32 24, %s29
        %s377 = smul.u32 3, %s30
        %s378 = smul.u32 48, %s30
        %s379 = smul.u32 24, %s29
        %s380 = smul.u32 24, %s29
        %p382 = scmp.eq.s32.totalorder %s30, 0
        // Predicated region
        $region65: #{tpu_custom_call.1} parent=43 // pred_check
          %p383 = pneg %p382
        $region66: #{tpu_custom_call.1} parent=43 // pred_check_branch
          %385 = sbr.rel (%p383) target = $region68
        $region67: #{tpu_custom_call.1} parent=43 // pred_region
          %386 = vst [vmem:[#allocation2] sm:$0xff] 0.0
          %387 = vst [vmem:[#allocation2 + $0x8] sm:$0xff] 0.0
          %388 = vst [vmem:[#allocation2 + $0x10] sm:$0xff] 0.0
          %389 = vst [vmem:[#allocation2 + $0x18] sm:$0xff] 0.0
          %390 = vst [vmem:[#allocation2 + $0x20] sm:$0xff] 0.0
          %391 = vst [vmem:[#allocation2 + $0x28] sm:$0xff] 0.0
          %392 = vst [vmem:[#allocation2 + $0x30] sm:$0xff] 0.0
          %393 = vst [vmem:[#allocation2 + $0x38] sm:$0xff] 0.0
          %394 = vst [vmem:[#allocation2 + $0x40] sm:$0xff] 0.0
          %395 = vst [vmem:[#allocation2 + $0x48] sm:$0xff] 0.0
          %396 = vst [vmem:[#allocation2 + $0x50] sm:$0xff] 0.0
          %397 = vst [vmem:[#allocation2 + $0x58] sm:$0xff] 0.0
          %398 = vst [vmem:[#allocation2 + $0x60] sm:$0xff] 0.0
          %399 = vst [vmem:[#allocation2 + $0x68] sm:$0xff] 0.0
          %400 = vst [vmem:[#allocation2 + $0x70] sm:$0xff] 0.0
          %401 = vst [vmem:[#allocation2 + $0x78] sm:$0xff] 0.0
          %402 = vst [vmem:[#allocation2 + $0x80] sm:$0xff] 0.0
          %403 = vst [vmem:[#allocation2 + $0x88] sm:$0xff] 0.0
          %404 = vst [vmem:[#allocation2 + $0x90] sm:$0xff] 0.0
          %405 = vst [vmem:[#allocation2 + $0x98] sm:$0xff] 0.0
          %406 = vst [vmem:[#allocation2 + $0xa0] sm:$0xff] 0.0
          %407 = vst [vmem:[#allocation2 + $0xa8] sm:$0xff] 0.0
          %408 = vst [vmem:[#allocation2 + $0xb0] sm:$0xff] 0.0
          %409 = vst [vmem:[#allocation2 + $0xb8] sm:$0xff] 0.0
        $region68: #{tpu_custom_call.1} parent=43 // pred_fallthru
          _
        %v410 = vld [vmem:[#allocation2] sm:$0xff]
        %v411 = vld [vmem:[#allocation2 + $0x8] sm:$0xff]
        %v412 = vld [vmem:[#allocation2 + $0x10] sm:$0xff]
        %v413 = vld [vmem:[#allocation2 + $0x18] sm:$0xff]
        %v414 = vld [vmem:[#allocation2 + $0x20] sm:$0xff]
        %v415 = vld [vmem:[#allocation2 + $0x28] sm:$0xff]
        %v416 = vld [vmem:[#allocation2 + $0x30] sm:$0xff]
        %v417 = vld [vmem:[#allocation2 + $0x38] sm:$0xff]
        %v418 = vld [vmem:[#allocation2 + $0x40] sm:$0xff]
        %v419 = vld [vmem:[#allocation2 + $0x48] sm:$0xff]
        %v420 = vld [vmem:[#allocation2 + $0x50] sm:$0xff]
        %v421 = vld [vmem:[#allocation2 + $0x58] sm:$0xff]
        %v422 = vld [vmem:[#allocation2 + $0x60] sm:$0xff]
        %v423 = vld [vmem:[#allocation2 + $0x68] sm:$0xff]
        %v424 = vld [vmem:[#allocation2 + $0x70] sm:$0xff]
        %v425 = vld [vmem:[#allocation2 + $0x78] sm:$0xff]
        %v426 = vld [vmem:[#allocation2 + $0x80] sm:$0xff]
        %v427 = vld [vmem:[#allocation2 + $0x88] sm:$0xff]
        %v428 = vld [vmem:[#allocation2 + $0x90] sm:$0xff]
        %v429 = vld [vmem:[#allocation2 + $0x98] sm:$0xff]
        %v430 = vld [vmem:[#allocation2 + $0xa0] sm:$0xff]
        %v431 = vld [vmem:[#allocation2 + $0xa8] sm:$0xff]
        %v432 = vld [vmem:[#allocation2 + $0xb0] sm:$0xff]
        %v433 = vld [vmem:[#allocation2 + $0xb8] sm:$0xff]
        %v434 = vld [vmem:[%s321] sm:$0xff]
        %v435 = vld [vmem:[%s321 + $0x8] sm:$0xf]
        %v436 = vld [vmem:[%s321 + $0xc] sm:$0xff]
        %v437 = vld [vmem:[%s321 + $0x14] sm:$0xf]
        %v438 = vld [vmem:[%s321 + $0x18] sm:$0xff]
        %v439 = vld [vmem:[%s321 + $0x20] sm:$0xf]
        %v440 = vld [vmem:[%s321 + $0x24] sm:$0xff]
        %v441 = vld [vmem:[%s321 + $0x2c] sm:$0xf]
        %v442 = vld [vmem:[%s321 + $0x30] sm:$0xff]
        %v443 = vld [vmem:[%s321 + $0x38] sm:$0xf]
        %v444 = vld [vmem:[%s321 + $0x3c] sm:$0xff]
        %v445 = vld [vmem:[%s321 + $0x44] sm:$0xf]
        %v446 = vld [vmem:[%s321 + $0x48] sm:$0xff]
        %v447 = vld [vmem:[%s321 + $0x50] sm:$0xf]
        %v448 = vld [vmem:[%s321 + $0x54] sm:$0xff]
        %v449 = vld [vmem:[%s321 + $0x5c] sm:$0xf]
        %v450 = vld [vmem:[%s321 + $0x60] sm:$0xff]
        %v451 = vld [vmem:[%s321 + $0x68] sm:$0xf]
        %v452 = vld [vmem:[%s321 + $0x6c] sm:$0xff]
        %v453 = vld [vmem:[%s321 + $0x74] sm:$0xf]
        %v454 = vld [vmem:[%s321 + $0x78] sm:$0xff]
        %v455 = vld [vmem:[%s321 + $0x80] sm:$0xf]
        %v456 = vld [vmem:[%s321 + $0x84] sm:$0xff]
        %v457 = vld [vmem:[%s321 + $0x8c] sm:$0xf]
        %v458 = vld [vmem:[%s321 + $0x90] sm:$0xff]
        %v459 = vld [vmem:[%s321 + $0x98] sm:$0xf]
        %v460 = vld [vmem:[%s321 + $0x9c] sm:$0xff]
        %v461 = vld [vmem:[%s321 + $0xa4] sm:$0xf]
        %v462 = vld [vmem:[%s321 + $0xa8] sm:$0xff]
        %v463 = vld [vmem:[%s321 + $0xb0] sm:$0xf]
        %v464 = vld [vmem:[%s321 + $0xb4] sm:$0xff]
        %v465 = vld [vmem:[%s321 + $0xbc] sm:$0xf]
        %v466 = vld [vmem:[%s321 + $0xc0] sm:$0xff]
        %v467 = vld [vmem:[%s321 + $0xc8] sm:$0xf]
        %v468 = vld [vmem:[%s321 + $0xcc] sm:$0xff]
        %v469 = vld [vmem:[%s321 + $0xd4] sm:$0xf]
        %v470 = vld [vmem:[%s321 + $0xd8] sm:$0xff]
        %v471 = vld [vmem:[%s321 + $0xe0] sm:$0xf]
        %v472 = vld [vmem:[%s321 + $0xe4] sm:$0xff]
        %v473 = vld [vmem:[%s321 + $0xec] sm:$0xf]
        %v474 = vld [vmem:[%s321 + $0xf0] sm:$0xff]
        %v475 = vld [vmem:[%s321 + $0xf8] sm:$0xf]
        %v476 = vld [vmem:[%s321 + $0xfc] sm:$0xff]
        %v477 = vld [vmem:[%s321 + $0x104] sm:$0xf]
        %v478 = vld [vmem:[%s321 + $0x108] sm:$0xff]
        %v479 = vld [vmem:[%s321 + $0x110] sm:$0xf]
        %v480 = vld [vmem:[%s321 + $0x114] sm:$0xff]
        %v481 = vld [vmem:[%s321 + $0x11c] sm:$0xf]
        %v482 = vld [vmem:[#allocation6] sm:$0xf]
        %v483 = vld [vmem:[#allocation6 + $0x4] sm:$0xf]
        %v484 = vld [vmem:[#allocation6 + $0x8] sm:$0xf]
        %v485 = vld [vmem:[#allocation6 + $0xc] sm:$0xf]
        %v486 = vld [vmem:[#allocation6 + $0x10] sm:$0xf]
        %v487 = vld [vmem:[#allocation6 + $0x14] sm:$0xf]
        %v488 = vld [vmem:[#allocation6 + $0x18] sm:$0xf]
        %v489 = vld [vmem:[#allocation6 + $0x1c] sm:$0xf]
        %v490 = vld [vmem:[#allocation6 + $0x20] sm:$0xf]
        %v491 = vld [vmem:[#allocation6 + $0x24] sm:$0xf]
        %v492 = vld [vmem:[#allocation6 + $0x28] sm:$0xf]
        %v493 = vld [vmem:[#allocation6 + $0x2c] sm:$0xf]
        %v494 = vld [vmem:[#allocation6 + $0x30] sm:$0xf]
        %v495 = vld [vmem:[#allocation6 + $0x34] sm:$0xf]
        %v496 = vld [vmem:[#allocation6 + $0x38] sm:$0xf]
        %v497 = vld [vmem:[#allocation6 + $0x3c] sm:$0xf]
        %v498 = vld [vmem:[#allocation6 + $0x40] sm:$0xf]
        %v499 = vld [vmem:[#allocation6 + $0x44] sm:$0xf]
        %v500 = vld [vmem:[#allocation6 + $0x48] sm:$0xf]
        %v501 = vld [vmem:[#allocation6 + $0x4c] sm:$0xf]
        %v502 = vld [vmem:[#allocation6 + $0x50] sm:$0xf]
        %v503 = vld [vmem:[#allocation6 + $0x54] sm:$0xf]
        %v504 = vld [vmem:[#allocation6 + $0x58] sm:$0xf]
        %v505 = vld [vmem:[#allocation6 + $0x5c] sm:$0xf]
        %v506 = vld [vmem:[#allocation6 + $0x60] sm:$0xf]
        %v507 = vld [vmem:[#allocation6 + $0x64] sm:$0xf]
        %v508 = vld [vmem:[#allocation6 + $0x68] sm:$0xf]
        %v509 = vld [vmem:[#allocation6 + $0x6c] sm:$0xf]
        %v510 = vld [vmem:[#allocation6 + $0x70] sm:$0xf]
        %v511 = vld [vmem:[#allocation6 + $0x74] sm:$0xf]
        %v512 = vld [vmem:[#allocation6 + $0x78] sm:$0xf]
        %v513 = vld [vmem:[#allocation6 + $0x7c] sm:$0xf]
        %v514 = vld [vmem:[#allocation6 + $0x80] sm:$0xf]
        %v515 = vld [vmem:[#allocation6 + $0x84] sm:$0xf]
        %v516 = vld [vmem:[#allocation6 + $0x88] sm:$0xf]
        %v517 = vld [vmem:[#allocation6 + $0x8c] sm:$0xf]
        %v518 = vld [vmem:[#allocation6 + $0x90] sm:$0xf]
        %v519 = vld [vmem:[#allocation6 + $0x94] sm:$0xf]
        %v520 = vld [vmem:[#allocation6 + $0x98] sm:$0xf]
        %v521 = vld [vmem:[#allocation6 + $0x9c] sm:$0xf]
        %v522 = vld [vmem:[#allocation6 + $0xa0] sm:$0xf]
        %v523 = vld [vmem:[#allocation6 + $0xa4] sm:$0xf]
        %v524 = vld [vmem:[#allocation6 + $0xa8] sm:$0xf]
        %v525 = vld [vmem:[#allocation6 + $0xac] sm:$0xf]
        %v526 = vld [vmem:[#allocation6 + $0xb0] sm:$0xf]
        %v527 = vld [vmem:[#allocation6 + $0xb4] sm:$0xf]
        %v528 = vld [vmem:[#allocation6 + $0xb8] sm:$0xf]
        %v529 = vld [vmem:[#allocation6 + $0xbc] sm:$0xf]
        %v578 = vunpack.c.l.b16 %v434
        %v579 = vunpack.c.h.b16 %v434
        %v580 = vunpack.c.l.b16 %v435
        %v581 = vunpack.c.l.b16 %v436
        %v582 = vunpack.c.h.b16 %v436
        %v583 = vunpack.c.l.b16 %v437
        %v584 = vunpack.c.l.b16 %v438
        %v585 = vunpack.c.h.b16 %v438
        %v586 = vunpack.c.l.b16 %v439
        %v587 = vunpack.c.l.b16 %v440
        %v588 = vunpack.c.h.b16 %v440
        %v589 = vunpack.c.l.b16 %v441
        %v590 = vunpack.c.l.b16 %v442
        %v591 = vunpack.c.h.b16 %v442
        %v592 = vunpack.c.l.b16 %v443
        %v593 = vunpack.c.l.b16 %v444
        %v594 = vunpack.c.h.b16 %v444
        %v595 = vunpack.c.l.b16 %v445
        %v596 = vunpack.c.l.b16 %v446
        %v597 = vunpack.c.h.b16 %v446
        %v598 = vunpack.c.l.b16 %v447
        %v599 = vunpack.c.l.b16 %v448
        %v600 = vunpack.c.h.b16 %v448
        %v601 = vunpack.c.l.b16 %v449
        %v602 = vunpack.c.l.b16 %v450
        %v603 = vunpack.c.h.b16 %v450
        %v604 = vunpack.c.l.b16 %v451
        %v605 = vunpack.c.l.b16 %v452
        %v606 = vunpack.c.h.b16 %v452
        %v607 = vunpack.c.l.b16 %v453
        %v608 = vunpack.c.l.b16 %v454
        %v609 = vunpack.c.h.b16 %v454
        %v610 = vunpack.c.l.b16 %v455
        %v611 = vunpack.c.l.b16 %v456
        %v612 = vunpack.c.h.b16 %v456
        %v613 = vunpack.c.l.b16 %v457
        %v614 = vunpack.c.l.b16 %v458
        %v615 = vunpack.c.h.b16 %v458
        %v616 = vunpack.c.l.b16 %v459
        %v617 = vunpack.c.l.b16 %v460
        %v618 = vunpack.c.h.b16 %v460
        %v619 = vunpack.c.l.b16 %v461
        %v620 = vunpack.c.l.b16 %v462
        %v621 = vunpack.c.h.b16 %v462
        %v622 = vunpack.c.l.b16 %v463
        %v623 = vunpack.c.l.b16 %v464
        %v624 = vunpack.c.h.b16 %v464
        %v625 = vunpack.c.l.b16 %v465
        %v626 = vunpack.c.l.b16 %v466
        %v627 = vunpack.c.h.b16 %v466
        %v628 = vunpack.c.l.b16 %v467
        %v629 = vunpack.c.l.b16 %v468
        %v630 = vunpack.c.h.b16 %v468
        %v631 = vunpack.c.l.b16 %v469
        %v632 = vunpack.c.l.b16 %v470
        %v633 = vunpack.c.h.b16 %v470
        %v634 = vunpack.c.l.b16 %v471
        %v635 = vunpack.c.l.b16 %v472
        %v636 = vunpack.c.h.b16 %v472
        %v637 = vunpack.c.l.b16 %v473
        %v638 = vunpack.c.l.b16 %v474
        %v639 = vunpack.c.h.b16 %v474
        %v640 = vunpack.c.l.b16 %v475
        %v641 = vunpack.c.l.b16 %v476
        %v642 = vunpack.c.h.b16 %v476
        %v643 = vunpack.c.l.b16 %v477
        %v644 = vunpack.c.l.b16 %v478
        %v645 = vunpack.c.h.b16 %v478
        %v646 = vunpack.c.l.b16 %v479
        %v647 = vunpack.c.l.b16 %v480
        %v648 = vunpack.c.h.b16 %v480
        %v649 = vunpack.c.l.b16 %v481
        %v650 = vpack.c.b16 %v581, %v578
        %v651 = vpack.c.b16 %v582, %v579
        %v652 = vpack.c.b16 %v583, %v580
        %v653 = vpack.c.b16 %v587, %v584
        %v654 = vpack.c.b16 %v588, %v585
        %v655 = vpack.c.b16 %v589, %v586
        %v656 = vpack.c.b16 %v593, %v590
        %v657 = vpack.c.b16 %v594, %v591
        %v658 = vpack.c.b16 %v595, %v592
        %v659 = vpack.c.b16 %v599, %v596
        %v660 = vpack.c.b16 %v600, %v597
        %v661 = vpack.c.b16 %v601, %v598
        %v662 = vpack.c.b16 %v605, %v602
        %v663 = vpack.c.b16 %v606, %v603
        %v664 = vpack.c.b16 %v607, %v604
        %v665 = vpack.c.b16 %v611, %v608
        %v666 = vpack.c.b16 %v612, %v609
        %v667 = vpack.c.b16 %v613, %v610
        %v668 = vpack.c.b16 %v617, %v614
        %v669 = vpack.c.b16 %v618, %v615
        %v670 = vpack.c.b16 %v619, %v616
        %v671 = vpack.c.b16 %v623, %v620
        %v672 = vpack.c.b16 %v624, %v621
        %v673 = vpack.c.b16 %v625, %v622
        %v674 = vpack.c.b16 %v629, %v626
        %v675 = vpack.c.b16 %v630, %v627
        %v676 = vpack.c.b16 %v631, %v628
        %v677 = vpack.c.b16 %v635, %v632
        %v678 = vpack.c.b16 %v636, %v633
        %v679 = vpack.c.b16 %v637, %v634
        %v680 = vpack.c.b16 %v641, %v638
        %v681 = vpack.c.b16 %v642, %v639
        %v682 = vpack.c.b16 %v643, %v640
        %v683 = vpack.c.b16 %v647, %v644
        %v684 = vpack.c.b16 %v648, %v645
        %v685 = vpack.c.b16 %v649, %v646
        %v770 = vunpack.c.l.b16 %v482
        %v771 = vunpack.c.l.b16 %v483
        %v772 = vunpack.c.l.b16 %v484
        %v773 = vunpack.c.l.b16 %v485
        %v774 = vunpack.c.l.b16 %v486
        %v775 = vunpack.c.l.b16 %v487
        %v776 = vunpack.c.l.b16 %v488
        %v777 = vunpack.c.l.b16 %v489
        %v778 = vunpack.c.l.b16 %v490
        %v779 = vunpack.c.l.b16 %v491
        %v780 = vunpack.c.l.b16 %v492
        %v781 = vunpack.c.l.b16 %v493
        %v782 = vunpack.c.l.b16 %v494
        %v783 = vunpack.c.l.b16 %v495
        %v784 = vunpack.c.l.b16 %v496
        %v785 = vunpack.c.l.b16 %v497
        %v786 = vunpack.c.l.b16 %v498
        %v787 = vunpack.c.l.b16 %v499
        %v788 = vunpack.c.l.b16 %v500
        %v789 = vunpack.c.l.b16 %v501
        %v790 = vunpack.c.l.b16 %v502
        %v791 = vunpack.c.l.b16 %v503
        %v792 = vunpack.c.l.b16 %v504
        %v793 = vunpack.c.l.b16 %v505
        %v794 = vunpack.c.l.b16 %v506
        %v795 = vunpack.c.l.b16 %v507
        %v796 = vunpack.c.l.b16 %v508
        %v797 = vunpack.c.l.b16 %v509
        %v798 = vunpack.c.l.b16 %v510
        %v799 = vunpack.c.l.b16 %v511
        %v800 = vunpack.c.l.b16 %v512
        %v801 = vunpack.c.l.b16 %v513
        %v802 = vunpack.c.l.b16 %v514
        %v803 = vunpack.c.l.b16 %v515
        %v804 = vunpack.c.l.b16 %v516
        %v805 = vunpack.c.l.b16 %v517
        %v806 = vunpack.c.l.b16 %v518
        %v807 = vunpack.c.l.b16 %v519
        %v808 = vunpack.c.l.b16 %v520
        %v809 = vunpack.c.l.b16 %v521
        %v810 = vunpack.c.l.b16 %v522
        %v811 = vunpack.c.l.b16 %v523
        %v812 = vunpack.c.l.b16 %v524
        %v813 = vunpack.c.l.b16 %v525
        %v814 = vunpack.c.l.b16 %v526
        %v815 = vunpack.c.l.b16 %v527
        %v816 = vunpack.c.l.b16 %v528
        %v817 = vunpack.c.l.b16 %v529
        %v818 = vpack.c.b16 %v771, %v770
        %v819 = vpack.c.b16 %v773, %v772
        %v820 = vpack.c.b16 %v775, %v774
        %v821 = vpack.c.b16 %v777, %v776
        %v822 = vpack.c.b16 %v779, %v778
        %v823 = vpack.c.b16 %v781, %v780
        %v824 = vpack.c.b16 %v783, %v782
        %v825 = vpack.c.b16 %v785, %v784
        %v826 = vpack.c.b16 %v787, %v786
        %v827 = vpack.c.b16 %v789, %v788
        %v828 = vpack.c.b16 %v791, %v790
        %v829 = vpack.c.b16 %v793, %v792
        %v830 = vpack.c.b16 %v795, %v794
        %v831 = vpack.c.b16 %v797, %v796
        %v832 = vpack.c.b16 %v799, %v798
        %v833 = vpack.c.b16 %v801, %v800
        %v834 = vpack.c.b16 %v803, %v802
        %v835 = vpack.c.b16 %v805, %v804
        %v836 = vpack.c.b16 %v807, %v806
        %v837 = vpack.c.b16 %v809, %v808
        %v838 = vpack.c.b16 %v811, %v810
        %v839 = vpack.c.b16 %v813, %v812
        %v840 = vpack.c.b16 %v815, %v814
        %v841 = vpack.c.b16 %v817, %v816
        %866 = vmatprep.subr.bf16.mxu0 0
        %867 = vmatpush1.bf16.msra.mxu0 %v825
        %868 = vmatprep.subr.bf16.mxu0 0
        %869 = vmatpush1.bf16.msra.mxu0 %v824
        %870 = vmatprep.subr.bf16.mxu0 0
        %871 = vmatpush1.bf16.msra.mxu0 %v823
        %872 = vmatprep.subr.bf16.mxu0 0
        %873 = vmatpush1.bf16.msra.mxu0 %v822
        %874 = vmatprep.subr.bf16.mxu0 0
        %875 = vmatpush1.bf16.msra.mxu0 %v821
        %876 = vmatprep.subr.bf16.mxu0 0
        %877 = vmatpush1.bf16.msra.mxu0 %v820
        %878 = vmatprep.subr.bf16.mxu0 0
        %879 = vmatpush1.bf16.msra.mxu0 %v819
        %880 = vmatprep.subr.bf16.mxu0 0
        %881 = vmatpush1.bf16.msra.mxu0 %v818
        %882 = vmatprep.subr.bf16.mxu0 0
        %883 = vmatpush2.bf16.msra.mxu0 %v833
        %884 = vmatprep.subr.bf16.mxu0 0
        %885 = vmatpush2.bf16.msra.mxu0 %v832
        %886 = vmatprep.subr.bf16.mxu0 0
        %887 = vmatpush2.bf16.msra.mxu0 %v831
        %888 = vmatprep.subr.bf16.mxu0 0
        %889 = vmatpush2.bf16.msra.mxu0 %v830
        %890 = vmatprep.subr.bf16.mxu0 0
        %891 = vmatpush2.bf16.msra.mxu0 %v829
        %892 = vmatprep.subr.bf16.mxu0 0
        %893 = vmatpush2.bf16.msra.mxu0 %v828
        %894 = vmatprep.subr.bf16.mxu0 0
        %895 = vmatpush2.bf16.msra.mxu0 %v827
        %896 = vmatprep.subr.bf16.mxu0 0
        %897 = vmatpush2.bf16.msra.mxu0 %v826
        %898 = vmatprep.mubr.bf16.mxu0 %v651
        %899 = vmatmul.mubr.bf16.gmra.mxu0 %v650
        %v900 = vpop.f32.mrf.mxu0
        %v901 = vadd.f32 0.0, %v900
        %v902 = vpop.f32.mrf.mxu0
        %v903 = vpop.f32.mrf.mxu0
        %v904 = vadd.f32 0.0, %v903
        %v905 = vpop.f32.mrf.mxu0
        %906 = vmatprep.mubr.bf16.mxu0 %v654
        %907 = vmatmul.mubr.bf16.gmra.mxu0 %v653
        %v908 = vpop.f32.mrf.mxu0
        %v909 = vadd.f32 0.0, %v908
        %v910 = vpop.f32.mrf.mxu0
        %v911 = vpop.f32.mrf.mxu0
        %v912 = vadd.f32 0.0, %v911
        %v913 = vpop.f32.mrf.mxu0
        %914 = vmatprep.mubr.bf16.mxu0 %v657
        %915 = vmatmul.mubr.bf16.gmra.mxu0 %v656
        %v916 = vpop.f32.mrf.mxu0
        %v917 = vadd.f32 0.0, %v916
        %v918 = vpop.f32.mrf.mxu0
        %v919 = vpop.f32.mrf.mxu0
        %v920 = vadd.f32 0.0, %v919
        %v921 = vpop.f32.mrf.mxu0
        %922 = vmatprep.mubr.bf16.mxu0 %v660
        %923 = vmatmul.mubr.bf16.gmra.mxu0 %v659
        %v924 = vpop.f32.mrf.mxu0
        %v925 = vadd.f32 0.0, %v924
        %v926 = vpop.f32.mrf.mxu0
        %v927 = vpop.f32.mrf.mxu0
        %v928 = vadd.f32 0.0, %v927
        %v929 = vpop.f32.mrf.mxu0
        %930 = vmatprep.mubr.bf16.mxu0 %v663
        %931 = vmatmul.mubr.bf16.gmra.mxu0 %v662
        %v932 = vpop.f32.mrf.mxu0
        %v933 = vadd.f32 0.0, %v932
        %v934 = vpop.f32.mrf.mxu0
        %v935 = vpop.f32.mrf.mxu0
        %v936 = vadd.f32 0.0, %v935
        %v937 = vpop.f32.mrf.mxu0
        %938 = vmatprep.mubr.bf16.mxu0 %v666
        %939 = vmatmul.mubr.bf16.gmra.mxu0 %v665
        %v940 = vpop.f32.mrf.mxu0
        %v941 = vadd.f32 0.0, %v940
        %v942 = vpop.f32.mrf.mxu0
        %v943 = vpop.f32.mrf.mxu0
        %v944 = vadd.f32 0.0, %v943
        %v945 = vpop.f32.mrf.mxu0
        %946 = vmatprep.mubr.bf16.mxu0 %v669
        %947 = vmatmul.mubr.bf16.gmra.mxu0 %v668
        %v948 = vpop.f32.mrf.mxu0
        %v949 = vadd.f32 0.0, %v948
        %v950 = vpop.f32.mrf.mxu0
        %v951 = vpop.f32.mrf.mxu0
        %v952 = vadd.f32 0.0, %v951
        %v953 = vpop.f32.mrf.mxu0
        %954 = vmatprep.mubr.bf16.mxu0 %v672
        %955 = vmatmul.mubr.bf16.gmra.mxu0 %v671
        %v956 = vpop.f32.mrf.mxu0
        %v957 = vadd.f32 0.0, %v956
        %v958 = vpop.f32.mrf.mxu0
        %v959 = vpop.f32.mrf.mxu0
        %v960 = vadd.f32 0.0, %v959
        %v961 = vpop.f32.mrf.mxu0
        %962 = vmatprep.mubr.bf16.mxu0 %v675
        %963 = vmatmul.mubr.bf16.gmra.mxu0 %v674
        %v964 = vpop.f32.mrf.mxu0
        %v965 = vadd.f32 0.0, %v964
        %v966 = vpop.f32.mrf.mxu0
        %v967 = vpop.f32.mrf.mxu0
        %v968 = vadd.f32 0.0, %v967
        %v969 = vpop.f32.mrf.mxu0
        %970 = vmatprep.mubr.bf16.mxu0 %v678
        %971 = vmatmul.mubr.bf16.gmra.mxu0 %v677
        %v972 = vpop.f32.mrf.mxu0
        %v973 = vadd.f32 0.0, %v972
        %v974 = vpop.f32.mrf.mxu0
        %v975 = vpop.f32.mrf.mxu0
        %v976 = vadd.f32 0.0, %v975
        %v977 = vpop.f32.mrf.mxu0
        %978 = vmatprep.mubr.bf16.mxu0 %v681
        %979 = vmatmul.mubr.bf16.gmra.mxu0 %v680
        %v980 = vpop.f32.mrf.mxu0
        %v981 = vadd.f32 0.0, %v980
        %v982 = vpop.f32.mrf.mxu0
        %v983 = vpop.f32.mrf.mxu0
        %v984 = vadd.f32 0.0, %v983
        %v985 = vpop.f32.mrf.mxu0
        %986 = vmatprep.mubr.bf16.mxu0 %v684
        %987 = vmatmul.mubr.bf16.gmra.mxu0 %v683
        %v988 = vpop.f32.mrf.mxu0
        %v989 = vadd.f32 0.0, %v988
        %v990 = vpop.f32.mrf.mxu0
        %v991 = vpop.f32.mrf.mxu0
        %v992 = vadd.f32 0.0, %v991
        %v993 = vpop.f32.mrf.mxu0
        %994 = vdwg.mxu0
        %995 = vmatprep.subr.bf16.mxu0 0
        %996 = vmatpush1.bf16.msra.mxu0 %v841
        %997 = vmatprep.subr.bf16.mxu0 0
        %998 = vmatpush1.bf16.msra.mxu0 %v840
        %999 = vmatprep.subr.bf16.mxu0 0
        %1000 = vmatpush1.bf16.msra.mxu0 %v839
        %1001 = vmatprep.subr.bf16.mxu0 0
        %1002 = vmatpush1.bf16.msra.mxu0 %v838
        %1003 = vmatprep.subr.bf16.mxu0 0
        %1004 = vmatpush1.bf16.msra.mxu0 %v837
        %1005 = vmatprep.subr.bf16.mxu0 0
        %1006 = vmatpush1.bf16.msra.mxu0 %v836
        %1007 = vmatprep.subr.bf16.mxu0 0
        %1008 = vmatpush1.bf16.msra.mxu0 %v835
        %1009 = vmatprep.subr.bf16.mxu0 0
        %1010 = vmatpush1.bf16.msra.mxu0 %v834
        %1011 = vmatprep.subr.bf16.mxu0 0
        %1012 = vmatpush2.bf16.msra.mxu0 0
        %1013 = vmatprep.subr.bf16.mxu0 0
        %1014 = vmatpush2.bf16.msra.mxu0 0
        %1015 = vmatprep.subr.bf16.mxu0 0
        %1016 = vmatpush2.bf16.msra.mxu0 0
        %1017 = vmatprep.subr.bf16.mxu0 0
        %1018 = vmatpush2.bf16.msra.mxu0 0
        %1019 = vmatprep.subr.bf16.mxu0 0
        %1020 = vmatpush2.bf16.msra.mxu0 0
        %1021 = vmatprep.subr.bf16.mxu0 0
        %1022 = vmatpush2.bf16.msra.mxu0 0
        %1023 = vmatprep.subr.bf16.mxu0 0
        %1024 = vmatpush2.bf16.msra.mxu0 0
        %1025 = vmatprep.subr.bf16.mxu0 0
        %1026 = vmatpush2.bf16.msra.mxu0 0
        %1027 = vmatprep.mubr.bf16.mxu0 0
        %1028 = vmatmul.mubr.bf16.gmra.mxu0 %v652
        %v1029 = vpop.f32.mrf.mxu0
        %v1030 = vadd.f32 %v901, %v1029
        %v1031 = vpop.f32.mrf.mxu0
        %v1032 = vpop.f32.mrf.mxu0
        %v1033 = vadd.f32 %v904, %v1032
        %v1034 = vpop.f32.mrf.mxu0
        %1035 = vmatprep.mubr.bf16.mxu0 0
        %1036 = vmatmul.mubr.bf16.gmra.mxu0 %v655
        %v1037 = vpop.f32.mrf.mxu0
        %v1038 = vadd.f32 %v909, %v1037
        %v1039 = vpop.f32.mrf.mxu0
        %v1040 = vpop.f32.mrf.mxu0
        %v1041 = vadd.f32 %v912, %v1040
        %v1042 = vpop.f32.mrf.mxu0
        %1043 = vmatprep.mubr.bf16.mxu0 0
        %1044 = vmatmul.mubr.bf16.gmra.mxu0 %v658
        %v1045 = vpop.f32.mrf.mxu0
        %v1046 = vadd.f32 %v917, %v1045
        %v1047 = vpop.f32.mrf.mxu0
        %v1048 = vpop.f32.mrf.mxu0
        %v1049 = vadd.f32 %v920, %v1048
        %v1050 = vpop.f32.mrf.mxu0
        %1051 = vmatprep.mubr.bf16.mxu0 0
        %1052 = vmatmul.mubr.bf16.gmra.mxu0 %v661
        %v1053 = vpop.f32.mrf.mxu0
        %v1054 = vadd.f32 %v925, %v1053
        %v1055 = vpop.f32.mrf.mxu0
        %v1056 = vpop.f32.mrf.mxu0
        %v1057 = vadd.f32 %v928, %v1056
        %v1058 = vpop.f32.mrf.mxu0
        %1059 = vmatprep.mubr.bf16.mxu0 0
        %1060 = vmatmul.mubr.bf16.gmra.mxu0 %v664
        %v1061 = vpop.f32.mrf.mxu0
        %v1062 = vadd.f32 %v933, %v1061
        %v1063 = vpop.f32.mrf.mxu0
        %v1064 = vpop.f32.mrf.mxu0
        %v1065 = vadd.f32 %v936, %v1064
        %v1066 = vpop.f32.mrf.mxu0
        %1067 = vmatprep.mubr.bf16.mxu0 0
        %1068 = vmatmul.mubr.bf16.gmra.mxu0 %v667
        %v1069 = vpop.f32.mrf.mxu0
        %v1070 = vadd.f32 %v941, %v1069
        %v1071 = vpop.f32.mrf.mxu0
        %v1072 = vpop.f32.mrf.mxu0
        %v1073 = vadd.f32 %v944, %v1072
        %v1074 = vpop.f32.mrf.mxu0
        %1075 = vmatprep.mubr.bf16.mxu0 0
        %1076 = vmatmul.mubr.bf16.gmra.mxu0 %v670
        %v1077 = vpop.f32.mrf.mxu0
        %v1078 = vadd.f32 %v949, %v1077
        %v1079 = vpop.f32.mrf.mxu0
        %v1080 = vpop.f32.mrf.mxu0
        %v1081 = vadd.f32 %v952, %v1080
        %v1082 = vpop.f32.mrf.mxu0
        %1083 = vmatprep.mubr.bf16.mxu0 0
        %1084 = vmatmul.mubr.bf16.gmra.mxu0 %v673
        %v1085 = vpop.f32.mrf.mxu0
        %v1086 = vadd.f32 %v957, %v1085
        %v1087 = vpop.f32.mrf.mxu0
        %v1088 = vpop.f32.mrf.mxu0
        %v1089 = vadd.f32 %v960, %v1088
        %v1090 = vpop.f32.mrf.mxu0
        %1091 = vmatprep.mubr.bf16.mxu0 0
        %1092 = vmatmul.mubr.bf16.gmra.mxu0 %v676
        %v1093 = vpop.f32.mrf.mxu0
        %v1094 = vadd.f32 %v965, %v1093
        %v1095 = vpop.f32.mrf.mxu0
        %v1096 = vpop.f32.mrf.mxu0
        %v1097 = vadd.f32 %v968, %v1096
        %v1098 = vpop.f32.mrf.mxu0
        %1099 = vmatprep.mubr.bf16.mxu0 0
        %1100 = vmatmul.mubr.bf16.gmra.mxu0 %v679
        %v1101 = vpop.f32.mrf.mxu0
        %v1102 = vadd.f32 %v973, %v1101
        %v1103 = vpop.f32.mrf.mxu0
        %v1104 = vpop.f32.mrf.mxu0
        %v1105 = vadd.f32 %v976, %v1104
        %v1106 = vpop.f32.mrf.mxu0
        %1107 = vmatprep.mubr.bf16.mxu0 0
        %1108 = vmatmul.mubr.bf16.gmra.mxu0 %v682
        %v1109 = vpop.f32.mrf.mxu0
        %v1110 = vadd.f32 %v981, %v1109
        %v1111 = vpop.f32.mrf.mxu0
        %v1112 = vpop.f32.mrf.mxu0
        %v1113 = vadd.f32 %v984, %v1112
        %v1114 = vpop.f32.mrf.mxu0
        %1115 = vmatprep.mubr.bf16.mxu0 0
        %1116 = vmatmul.mubr.bf16.gmra.mxu0 %v685
        %v1117 = vpop.f32.mrf.mxu0
        %v1118 = vadd.f32 %v989, %v1117
        %v1119 = vpop.f32.mrf.mxu0
        %v1120 = vpop.f32.mrf.mxu0
        %v1121 = vadd.f32 %v992, %v1120
        %v1122 = vpop.f32.mrf.mxu0
        %1123 = vdwg.mxu0
        %v1124 = vadd.f32 %v410, %v1030
        %v1125 = vadd.f32 %v411, %v1033
        %v1126 = vadd.f32 %v412, %v1038
        %v1127 = vadd.f32 %v413, %v1041
        %v1128 = vadd.f32 %v414, %v1046
        %v1129 = vadd.f32 %v415, %v1049
        %v1130 = vadd.f32 %v416, %v1054
        %v1131 = vadd.f32 %v417, %v1057
        %v1132 = vadd.f32 %v418, %v1062
        %v1133 = vadd.f32 %v419, %v1065
        %v1134 = vadd.f32 %v420, %v1070
        %v1135 = vadd.f32 %v421, %v1073
        %v1136 = vadd.f32 %v422, %v1078
        %v1137 = vadd.f32 %v423, %v1081
        %v1138 = vadd.f32 %v424, %v1086
        %v1139 = vadd.f32 %v425, %v1089
        %v1140 = vadd.f32 %v426, %v1094
        %v1141 = vadd.f32 %v427, %v1097
        %v1142 = vadd.f32 %v428, %v1102
        %v1143 = vadd.f32 %v429, %v1105
        %v1144 = vadd.f32 %v430, %v1110
        %v1145 = vadd.f32 %v431, %v1113
        %v1146 = vadd.f32 %v432, %v1118
        %v1147 = vadd.f32 %v433, %v1121
        %1148 = vst [vmem:[#allocation2] sm:$0xff] %v1124
        %1149 = vst [vmem:[#allocation2 + $0x8] sm:$0xff] %v1125
        %1150 = vst [vmem:[#allocation2 + $0x10] sm:$0xff] %v1126
        %1151 = vst [vmem:[#allocation2 + $0x18] sm:$0xff] %v1127
        %1152 = vst [vmem:[#allocation2 + $0x20] sm:$0xff] %v1128
        %1153 = vst [vmem:[#allocation2 + $0x28] sm:$0xff] %v1129
        %1154 = vst [vmem:[#allocation2 + $0x30] sm:$0xff] %v1130
        %1155 = vst [vmem:[#allocation2 + $0x38] sm:$0xff] %v1131
        %1156 = vst [vmem:[#allocation2 + $0x40] sm:$0xff] %v1132
        %1157 = vst [vmem:[#allocation2 + $0x48] sm:$0xff] %v1133
        %1158 = vst [vmem:[#allocation2 + $0x50] sm:$0xff] %v1134
        %1159 = vst [vmem:[#allocation2 + $0x58] sm:$0xff] %v1135
        %1160 = vst [vmem:[#allocation2 + $0x60] sm:$0xff] %v1136
        %1161 = vst [vmem:[#allocation2 + $0x68] sm:$0xff] %v1137
        %1162 = vst [vmem:[#allocation2 + $0x70] sm:$0xff] %v1138
        %1163 = vst [vmem:[#allocation2 + $0x78] sm:$0xff] %v1139
        %1164 = vst [vmem:[#allocation2 + $0x80] sm:$0xff] %v1140
        %1165 = vst [vmem:[#allocation2 + $0x88] sm:$0xff] %v1141
        %1166 = vst [vmem:[#allocation2 + $0x90] sm:$0xff] %v1142
        %1167 = vst [vmem:[#allocation2 + $0x98] sm:$0xff] %v1143
        %1168 = vst [vmem:[#allocation2 + $0xa0] sm:$0xff] %v1144
        %1169 = vst [vmem:[#allocation2 + $0xa8] sm:$0xff] %v1145
        %1170 = vst [vmem:[#allocation2 + $0xb0] sm:$0xff] %v1146
        %1171 = vst [vmem:[#allocation2 + $0xb8] sm:$0xff] %v1147
        // Predicated region
        $region69: #{tpu_custom_call.1} parent=43 // pred_check
          %p1172 = pneg %p382
        $region70: #{tpu_custom_call.1} parent=43 // pred_check_branch
          %1174 = sbr.rel (%p1172) target = $region72
        $region71: #{tpu_custom_call.1} parent=43 // pred_region
          %v1175 = vld [vmem:[#allocation2] sm:$0xff]
          %v1176 = vld [vmem:[#allocation2 + $0x8] sm:$0xff]
          %v1177 = vld [vmem:[#allocation2 + $0x10] sm:$0xff]
          %v1178 = vld [vmem:[#allocation2 + $0x18] sm:$0xff]
          %v1179 = vld [vmem:[#allocation2 + $0x20] sm:$0xff]
          %v1180 = vld [vmem:[#allocation2 + $0x28] sm:$0xff]
          %v1181 = vld [vmem:[#allocation2 + $0x30] sm:$0xff]
          %v1182 = vld [vmem:[#allocation2 + $0x38] sm:$0xff]
          %v1183 = vld [vmem:[#allocation2 + $0x40] sm:$0xff]
          %v1184 = vld [vmem:[#allocation2 + $0x48] sm:$0xff]
          %v1185 = vld [vmem:[#allocation2 + $0x50] sm:$0xff]
          %v1186 = vld [vmem:[#allocation2 + $0x58] sm:$0xff]
          %v1187 = vld [vmem:[#allocation2 + $0x60] sm:$0xff]
          %v1188 = vld [vmem:[#allocation2 + $0x68] sm:$0xff]
          %v1189 = vld [vmem:[#allocation2 + $0x70] sm:$0xff]
          %v1190 = vld [vmem:[#allocation2 + $0x78] sm:$0xff]
          %v1191 = vld [vmem:[#allocation2 + $0x80] sm:$0xff]
          %v1192 = vld [vmem:[#allocation2 + $0x88] sm:$0xff]
          %v1193 = vld [vmem:[#allocation2 + $0x90] sm:$0xff]
          %v1194 = vld [vmem:[#allocation2 + $0x98] sm:$0xff]
          %v1195 = vld [vmem:[#allocation2 + $0xa0] sm:$0xff]
          %v1196 = vld [vmem:[#allocation2 + $0xa8] sm:$0xff]
          %v1197 = vld [vmem:[#allocation2 + $0xb0] sm:$0xff]
          %v1198 = vld [vmem:[#allocation2 + $0xb8] sm:$0xff]
          %v1199 = vmax.f32 %v1175, 1.0
          %v1200 = vmax.f32 %v1176, 1.0
          %v1201 = vmax.f32 %v1177, 1.0
          %v1202 = vmax.f32 %v1178, 1.0
          %v1203 = vmax.f32 %v1179, 1.0
          %v1204 = vmax.f32 %v1180, 1.0
          %v1205 = vmax.f32 %v1181, 1.0
          %v1206 = vmax.f32 %v1182, 1.0
          %v1207 = vmax.f32 %v1183, 1.0
          %v1208 = vmax.f32 %v1184, 1.0
          %v1209 = vmax.f32 %v1185, 1.0
          %v1210 = vmax.f32 %v1186, 1.0
          %v1211 = vmax.f32 %v1187, 1.0
          %v1212 = vmax.f32 %v1188, 1.0
          %v1213 = vmax.f32 %v1189, 1.0
          %v1214 = vmax.f32 %v1190, 1.0
          %v1215 = vmax.f32 %v1191, 1.0
          %v1216 = vmax.f32 %v1192, 1.0
          %v1217 = vmax.f32 %v1193, 1.0
          %v1218 = vmax.f32 %v1194, 1.0
          %v1219 = vmax.f32 %v1195, 1.0
          %v1220 = vmax.f32 %v1196, 1.0
          %v1221 = vmax.f32 %v1197, 1.0
          %v1222 = vmax.f32 %v1198, 1.0
          %1224 = vset.pattern.permute.xlu0 16
          %1225 = vperm.xlu0 %1224, %v1199
          %v1226 = vpop.permute.xlu0 %1225
          %1229 = vset.pattern.permute.xlu0 16
          %1230 = vperm.xlu0 %1229, %v1200
          %v1231 = vpop.permute.xlu0 %1230
          %1234 = vset.pattern.permute.xlu0 16
          %1235 = vperm.xlu0 %1234, %v1201
          %v1236 = vpop.permute.xlu0 %1235
          %1239 = vset.pattern.permute.xlu0 16
          %1240 = vperm.xlu0 %1239, %v1202
          %v1241 = vpop.permute.xlu0 %1240
          %1244 = vset.pattern.permute.xlu0 16
          %1245 = vperm.xlu0 %1244, %v1203
          %v1246 = vpop.permute.xlu0 %1245
          %1249 = vset.pattern.permute.xlu0 16
          %1250 = vperm.xlu0 %1249, %v1204
          %v1251 = vpop.permute.xlu0 %1250
          %1254 = vset.pattern.permute.xlu0 16
          %1255 = vperm.xlu0 %1254, %v1205
          %v1256 = vpop.permute.xlu0 %1255
          %1259 = vset.pattern.permute.xlu0 16
          %1260 = vperm.xlu0 %1259, %v1206
          %v1261 = vpop.permute.xlu0 %1260
          %1264 = vset.pattern.permute.xlu0 16
          %1265 = vperm.xlu0 %1264, %v1207
          %v1266 = vpop.permute.xlu0 %1265
          %1269 = vset.pattern.permute.xlu0 16
          %1270 = vperm.xlu0 %1269, %v1208
          %v1271 = vpop.permute.xlu0 %1270
          %1274 = vset.pattern.permute.xlu0 16
          %1275 = vperm.xlu0 %1274, %v1209
          %v1276 = vpop.permute.xlu0 %1275
          %1279 = vset.pattern.permute.xlu0 16
          %1280 = vperm.xlu0 %1279, %v1210
          %v1281 = vpop.permute.xlu0 %1280
          %1284 = vset.pattern.permute.xlu0 16
          %1285 = vperm.xlu0 %1284, %v1211
          %v1286 = vpop.permute.xlu0 %1285
          %1289 = vset.pattern.permute.xlu0 16
          %1290 = vperm.xlu0 %1289, %v1212
          %v1291 = vpop.permute.xlu0 %1290
          %1294 = vset.pattern.permute.xlu0 16
          %1295 = vperm.xlu0 %1294, %v1213
          %v1296 = vpop.permute.xlu0 %1295
          %1299 = vset.pattern.permute.xlu0 16
          %1300 = vperm.xlu0 %1299, %v1214
          %v1301 = vpop.permute.xlu0 %1300
          %1304 = vset.pattern.permute.xlu0 16
          %1305 = vperm.xlu0 %1304, %v1215
          %v1306 = vpop.permute.xlu0 %1305
          %1309 = vset.pattern.permute.xlu0 16
          %1310 = vperm.xlu0 %1309, %v1216
          %v1311 = vpop.permute.xlu0 %1310
          %1314 = vset.pattern.permute.xlu0 16
          %1315 = vperm.xlu0 %1314, %v1217
          %v1316 = vpop.permute.xlu0 %1315
          %1319 = vset.pattern.permute.xlu0 16
          %1320 = vperm.xlu0 %1319, %v1218
          %v1321 = vpop.permute.xlu0 %1320
          %1324 = vset.pattern.permute.xlu0 16
          %1325 = vperm.xlu0 %1324, %v1219
          %v1326 = vpop.permute.xlu0 %1325
          %1329 = vset.pattern.permute.xlu0 16
          %1330 = vperm.xlu0 %1329, %v1220
          %v1331 = vpop.permute.xlu0 %1330
          %1334 = vset.pattern.permute.xlu0 16
          %1335 = vperm.xlu0 %1334, %v1221
          %v1336 = vpop.permute.xlu0 %1335
          %1339 = vset.pattern.permute.xlu0 16
          %1340 = vperm.xlu0 %1339, %v1222
          %v1341 = vpop.permute.xlu0 %1340
          %v1343 = vrcp.pop %v1226
          %v1344 = vmul.f32 %v1175, %v1343
          %v1345 = vrcp.pop %v1231
          %v1346 = vmul.f32 %v1176, %v1345
          %v1347 = vrcp.pop %v1236
          %v1348 = vmul.f32 %v1177, %v1347
          %v1349 = vrcp.pop %v1241
          %v1350 = vmul.f32 %v1178, %v1349
          %v1351 = vrcp.pop %v1246
          %v1352 = vmul.f32 %v1179, %v1351
          %v1353 = vrcp.pop %v1251
          %v1354 = vmul.f32 %v1180, %v1353
          %v1355 = vrcp.pop %v1256
          %v1356 = vmul.f32 %v1181, %v1355
          %v1357 = vrcp.pop %v1261
          %v1358 = vmul.f32 %v1182, %v1357
          %v1359 = vrcp.pop %v1266
          %v1360 = vmul.f32 %v1183, %v1359
          %v1361 = vrcp.pop %v1271
          %v1362 = vmul.f32 %v1184, %v1361
          %v1363 = vrcp.pop %v1276
          %v1364 = vmul.f32 %v1185, %v1363
          %v1365 = vrcp.pop %v1281
          %v1366 = vmul.f32 %v1186, %v1365
          %v1367 = vrcp.pop %v1286
          %v1368 = vmul.f32 %v1187, %v1367
          %v1369 = vrcp.pop %v1291
          %v1370 = vmul.f32 %v1188, %v1369
          %v1371 = vrcp.pop %v1296
          %v1372 = vmul.f32 %v1189, %v1371
          %v1373 = vrcp.pop %v1301
          %v1374 = vmul.f32 %v1190, %v1373
          %v1375 = vrcp.pop %v1306
          %v1376 = vmul.f32 %v1191, %v1375
          %v1377 = vrcp.pop %v1311
          %v1378 = vmul.f32 %v1192, %v1377
          %v1379 = vrcp.pop %v1316
          %v1380 = vmul.f32 %v1193, %v1379
          %v1381 = vrcp.pop %v1321
          %v1382 = vmul.f32 %v1194, %v1381
          %v1383 = vrcp.pop %v1326
          %v1384 = vmul.f32 %v1195, %v1383
          %v1385 = vrcp.pop %v1331
          %v1386 = vmul.f32 %v1196, %v1385
          %v1387 = vrcp.pop %v1336
          %v1388 = vmul.f32 %v1197, %v1387
          %v1389 = vrcp.pop %v1341
          %v1390 = vmul.f32 %v1198, %v1389
          %v1391 = vld [vmem:[%s334] sm:$0xff]
          %v1392 = vld [vmem:[%s334 + $0x8] sm:$0xff]
          %v1393 = vld [vmem:[%s334 + $0x10] sm:$0xff]
          %v1394 = vld [vmem:[%s334 + $0x18] sm:$0xff]
          %v1395 = vld [vmem:[%s334 + $0x20] sm:$0xff]
          %v1396 = vld [vmem:[%s334 + $0x28] sm:$0xff]
          %v1397 = vld [vmem:[%s334 + $0x30] sm:$0xff]
          %v1398 = vld [vmem:[%s334 + $0x38] sm:$0xff]
          %v1399 = vld [vmem:[%s334 + $0x40] sm:$0xff]
          %v1400 = vld [vmem:[%s334 + $0x48] sm:$0xff]
          %v1401 = vld [vmem:[%s334 + $0x50] sm:$0xff]
          %v1402 = vld [vmem:[%s334 + $0x58] sm:$0xff]
          %v1403 = vld [vmem:[%s334 + $0x60] sm:$0xff]
          %v1404 = vld [vmem:[%s334 + $0x68] sm:$0xff]
          %v1405 = vld [vmem:[%s334 + $0x70] sm:$0xff]
          %v1406 = vld [vmem:[%s334 + $0x78] sm:$0xff]
          %v1407 = vld [vmem:[%s334 + $0x80] sm:$0xff]
          %v1408 = vld [vmem:[%s334 + $0x88] sm:$0xff]
          %v1409 = vld [vmem:[%s334 + $0x90] sm:$0xff]
          %v1410 = vld [vmem:[%s334 + $0x98] sm:$0xff]
          %v1411 = vld [vmem:[%s334 + $0xa0] sm:$0xff]
          %v1412 = vld [vmem:[%s334 + $0xa8] sm:$0xff]
          %v1413 = vld [vmem:[%s334 + $0xb0] sm:$0xff]
          %v1414 = vld [vmem:[%s334 + $0xb8] sm:$0xff]
          %v1415 = vld [vmem:[#allocation9] sm:$0xff]
          %v1416 = vld [vmem:[#allocation9 + $0x8] sm:$0xff]
          %v1417 = vld [vmem:[#allocation9 + $0x10] sm:$0xff]
          %v1418 = vld [vmem:[#allocation9 + $0x18] sm:$0xff]
          %v1419 = vld [vmem:[#allocation9 + $0x20] sm:$0xff]
          %v1420 = vld [vmem:[#allocation9 + $0x28] sm:$0xff]
          %v1421 = vld [vmem:[#allocation9 + $0x30] sm:$0xff]
          %v1422 = vld [vmem:[#allocation9 + $0x38] sm:$0xff]
          %v1423 = vld [vmem:[#allocation9 + $0x40] sm:$0xff]
          %v1424 = vld [vmem:[#allocation9 + $0x48] sm:$0xff]
          %v1425 = vld [vmem:[#allocation9 + $0x50] sm:$0xff]
          %v1426 = vld [vmem:[#allocation9 + $0x58] sm:$0xff]
          %v1427 = vld [vmem:[#allocation9 + $0x60] sm:$0xff]
          %v1428 = vld [vmem:[#allocation9 + $0x68] sm:$0xff]
          %v1429 = vld [vmem:[#allocation9 + $0x70] sm:$0xff]
          %v1430 = vld [vmem:[#allocation9 + $0x78] sm:$0xff]
          %v1431 = vld [vmem:[#allocation10] sm:$0xff]
          %v1432 = vld [vmem:[#allocation10 + $0x8] sm:$0xff]
          %v1433 = vld [vmem:[#allocation10 + $0x10] sm:$0xff]
          %v1434 = vld [vmem:[#allocation10 + $0x18] sm:$0xff]
          %v1435 = vld [vmem:[#allocation10 + $0x20] sm:$0xff]
          %v1436 = vld [vmem:[#allocation10 + $0x28] sm:$0xff]
          %v1437 = vld [vmem:[#allocation10 + $0x30] sm:$0xff]
          %v1438 = vld [vmem:[#allocation10 + $0x38] sm:$0xff]
          %v1439 = vld [vmem:[#allocation10 + $0x40] sm:$0xff]
          %v1440 = vld [vmem:[#allocation10 + $0x48] sm:$0xff]
          %v1441 = vld [vmem:[#allocation10 + $0x50] sm:$0xff]
          %v1442 = vld [vmem:[#allocation10 + $0x58] sm:$0xff]
          %v1443 = vld [vmem:[#allocation10 + $0x60] sm:$0xff]
          %v1444 = vld [vmem:[#allocation10 + $0x68] sm:$0xff]
          %v1445 = vld [vmem:[#allocation10 + $0x70] sm:$0xff]
          %v1446 = vld [vmem:[#allocation10 + $0x78] sm:$0xff]
          %1447 = vmatprep.subr.mxu0 0.0
          %1448 = vmatpush1.msra.mxu0 %v1446
          %1449 = vmatprep.subr.mxu0 0.0
          %1450 = vmatpush1.msra.mxu0 %v1445
          %1451 = vmatprep.subr.mxu0 0.0
          %1452 = vmatpush1.msra.mxu0 %v1444
          %1453 = vmatprep.subr.mxu0 0.0
          %1454 = vmatpush1.msra.mxu0 %v1443
          %1455 = vmatprep.subr.mxu0 0.0
          %1456 = vmatpush1.msra.mxu0 %v1442
          %1457 = vmatprep.subr.mxu0 0.0
          %1458 = vmatpush1.msra.mxu0 %v1441
          %1459 = vmatprep.subr.mxu0 0.0
          %1460 = vmatpush1.msra.mxu0 %v1440
          %1461 = vmatprep.subr.mxu0 0.0
          %1462 = vmatpush1.msra.mxu0 %v1439
          %1463 = vmatprep.subr.mxu0 0.0
          %1464 = vmatpush1.msra.mxu0 %v1438
          %1465 = vmatprep.subr.mxu0 0.0
          %1466 = vmatpush1.msra.mxu0 %v1437
          %1467 = vmatprep.subr.mxu0 0.0
          %1468 = vmatpush1.msra.mxu0 %v1436
          %1469 = vmatprep.subr.mxu0 0.0
          %1470 = vmatpush1.msra.mxu0 %v1435
          %1471 = vmatprep.subr.mxu0 0.0
          %1472 = vmatpush1.msra.mxu0 %v1434
          %1473 = vmatprep.subr.mxu0 0.0
          %1474 = vmatpush1.msra.mxu0 %v1433
          %1475 = vmatprep.subr.mxu0 0.0
          %1476 = vmatpush1.msra.mxu0 %v1432
          %1477 = vmatprep.subr.mxu0 0.0
          %1478 = vmatpush1.msra.mxu0 %v1431
          %1479 = vmatprep.subr.mxu0 0.0
          %1480 = vmatpush2.msra.mxu0 0.0
          %1481 = vmatprep.subr.mxu0 0.0
          %1482 = vmatpush2.msra.mxu0 0.0
          %1483 = vmatprep.subr.mxu0 0.0
          %1484 = vmatpush2.msra.mxu0 0.0
          %1485 = vmatprep.subr.mxu0 0.0
          %1486 = vmatpush2.msra.mxu0 0.0
          %1487 = vmatprep.subr.mxu0 0.0
          %1488 = vmatpush2.msra.mxu0 0.0
          %1489 = vmatprep.subr.mxu0 0.0
          %1490 = vmatpush2.msra.mxu0 0.0
          %1491 = vmatprep.subr.mxu0 0.0
          %1492 = vmatpush2.msra.mxu0 0.0
          %1493 = vmatprep.subr.mxu0 0.0
          %1494 = vmatpush2.msra.mxu0 0.0
          %1495 = vmatprep.subr.mxu0 0.0
          %1496 = vmatpush2.msra.mxu0 0.0
          %1497 = vmatprep.subr.mxu0 0.0
          %1498 = vmatpush2.msra.mxu0 0.0
          %1499 = vmatprep.subr.mxu0 0.0
          %1500 = vmatpush2.msra.mxu0 0.0
          %1501 = vmatprep.subr.mxu0 0.0
          %1502 = vmatpush2.msra.mxu0 0.0
          %1503 = vmatprep.subr.mxu0 0.0
          %1504 = vmatpush2.msra.mxu0 0.0
          %1505 = vmatprep.subr.mxu0 0.0
          %1506 = vmatpush2.msra.mxu0 0.0
          %1507 = vmatprep.subr.mxu0 0.0
          %1508 = vmatpush2.msra.mxu0 0.0
          %1509 = vmatprep.subr.mxu0 0.0
          %1510 = vmatpush2.msra.mxu0 0.0
          %1511 = vmatprep.mubr.f32.mxu0 0.0
          %1512 = vmatmul.mubr.f32.gmra.mxu0 %v1344
          %v1513 = vpop.f32.mrf.mxu0
          %v1514 = vadd.f32 0.0, %v1513
          %v1515 = vpop.f32.mrf.mxu0
          %1516 = vmatprep.mubr.f32.mxu0 0.0
          %1517 = vmatmul.mubr.f32.gmra.mxu0 %v1346
          %v1518 = vpop.f32.mrf.mxu0
          %v1519 = vadd.f32 0.0, %v1518
          %v1520 = vpop.f32.mrf.mxu0
          %1521 = vmatprep.mubr.f32.mxu0 0.0
          %1522 = vmatmul.mubr.f32.gmra.mxu0 %v1348
          %v1523 = vpop.f32.mrf.mxu0
          %v1524 = vadd.f32 0.0, %v1523
          %v1525 = vpop.f32.mrf.mxu0
          %1526 = vmatprep.mubr.f32.mxu0 0.0
          %1527 = vmatmul.mubr.f32.gmra.mxu0 %v1350
          %v1528 = vpop.f32.mrf.mxu0
          %v1529 = vadd.f32 0.0, %v1528
          %v1530 = vpop.f32.mrf.mxu0
          %1531 = vmatprep.mubr.f32.mxu0 0.0
          %1532 = vmatmul.mubr.f32.gmra.mxu0 %v1352
          %v1533 = vpop.f32.mrf.mxu0
          %v1534 = vadd.f32 0.0, %v1533
          %v1535 = vpop.f32.mrf.mxu0
          %1536 = vmatprep.mubr.f32.mxu0 0.0
          %1537 = vmatmul.mubr.f32.gmra.mxu0 %v1354
          %v1538 = vpop.f32.mrf.mxu0
          %v1539 = vadd.f32 0.0, %v1538
          %v1540 = vpop.f32.mrf.mxu0
          %1541 = vmatprep.mubr.f32.mxu0 0.0
          %1542 = vmatmul.mubr.f32.gmra.mxu0 %v1356
          %v1543 = vpop.f32.mrf.mxu0
          %v1544 = vadd.f32 0.0, %v1543
          %v1545 = vpop.f32.mrf.mxu0
          %1546 = vmatprep.mubr.f32.mxu0 0.0
          %1547 = vmatmul.mubr.f32.gmra.mxu0 %v1358
          %v1548 = vpop.f32.mrf.mxu0
          %v1549 = vadd.f32 0.0, %v1548
          %v1550 = vpop.f32.mrf.mxu0
          %1551 = vmatprep.mubr.f32.mxu0 0.0
          %1552 = vmatmul.mubr.f32.gmra.mxu0 %v1360
          %v1553 = vpop.f32.mrf.mxu0
          %v1554 = vadd.f32 0.0, %v1553
          %v1555 = vpop.f32.mrf.mxu0
          %1556 = vmatprep.mubr.f32.mxu0 0.0
          %1557 = vmatmul.mubr.f32.gmra.mxu0 %v1362
          %v1558 = vpop.f32.mrf.mxu0
          %v1559 = vadd.f32 0.0, %v1558
          %v1560 = vpop.f32.mrf.mxu0
          %1561 = vmatprep.mubr.f32.mxu0 0.0
          %1562 = vmatmul.mubr.f32.gmra.mxu0 %v1364
          %v1563 = vpop.f32.mrf.mxu0
          %v1564 = vadd.f32 0.0, %v1563
          %v1565 = vpop.f32.mrf.mxu0
          %1566 = vmatprep.mubr.f32.mxu0 0.0
          %1567 = vmatmul.mubr.f32.gmra.mxu0 %v1366
          %v1568 = vpop.f32.mrf.mxu0
          %v1569 = vadd.f32 0.0, %v1568
          %v1570 = vpop.f32.mrf.mxu0
          %1571 = vmatprep.mubr.f32.mxu0 0.0
          %1572 = vmatmul.mubr.f32.gmra.mxu0 %v1368
          %v1573 = vpop.f32.mrf.mxu0
          %v1574 = vadd.f32 0.0, %v1573
          %v1575 = vpop.f32.mrf.mxu0
          %1576 = vmatprep.mubr.f32.mxu0 0.0
          %1577 = vmatmul.mubr.f32.gmra.mxu0 %v1370
          %v1578 = vpop.f32.mrf.mxu0
          %v1579 = vadd.f32 0.0, %v1578
          %v1580 = vpop.f32.mrf.mxu0
          %1581 = vmatprep.mubr.f32.mxu0 0.0
          %1582 = vmatmul.mubr.f32.gmra.mxu0 %v1372
          %v1583 = vpop.f32.mrf.mxu0
          %v1584 = vadd.f32 0.0, %v1583
          %v1585 = vpop.f32.mrf.mxu0
          %1586 = vmatprep.mubr.f32.mxu0 0.0
          %1587 = vmatmul.mubr.f32.gmra.mxu0 %v1374
          %v1588 = vpop.f32.mrf.mxu0
          %v1589 = vadd.f32 0.0, %v1588
          %v1590 = vpop.f32.mrf.mxu0
          %1591 = vmatprep.mubr.f32.mxu0 0.0
          %1592 = vmatmul.mubr.f32.gmra.mxu0 %v1376
          %v1593 = vpop.f32.mrf.mxu0
          %v1594 = vadd.f32 0.0, %v1593
          %v1595 = vpop.f32.mrf.mxu0
          %1596 = vmatprep.mubr.f32.mxu0 0.0
          %1597 = vmatmul.mubr.f32.gmra.mxu0 %v1378
          %v1598 = vpop.f32.mrf.mxu0
          %v1599 = vadd.f32 0.0, %v1598
          %v1600 = vpop.f32.mrf.mxu0
          %1601 = vmatprep.mubr.f32.mxu0 0.0
          %1602 = vmatmul.mubr.f32.gmra.mxu0 %v1380
          %v1603 = vpop.f32.mrf.mxu0
          %v1604 = vadd.f32 0.0, %v1603
          %v1605 = vpop.f32.mrf.mxu0
          %1606 = vmatprep.mubr.f32.mxu0 0.0
          %1607 = vmatmul.mubr.f32.gmra.mxu0 %v1382
          %v1608 = vpop.f32.mrf.mxu0
          %v1609 = vadd.f32 0.0, %v1608
          %v1610 = vpop.f32.mrf.mxu0
          %1611 = vmatprep.mubr.f32.mxu0 0.0
          %1612 = vmatmul.mubr.f32.gmra.mxu0 %v1384
          %v1613 = vpop.f32.mrf.mxu0
          %v1614 = vadd.f32 0.0, %v1613
          %v1615 = vpop.f32.mrf.mxu0
          %1616 = vmatprep.mubr.f32.mxu0 0.0
          %1617 = vmatmul.mubr.f32.gmra.mxu0 %v1386
          %v1618 = vpop.f32.mrf.mxu0
          %v1619 = vadd.f32 0.0, %v1618
          %v1620 = vpop.f32.mrf.mxu0
          %1621 = vmatprep.mubr.f32.mxu0 0.0
          %1622 = vmatmul.mubr.f32.gmra.mxu0 %v1388
          %v1623 = vpop.f32.mrf.mxu0
          %v1624 = vadd.f32 0.0, %v1623
          %v1625 = vpop.f32.mrf.mxu0
          %1626 = vmatprep.mubr.f32.mxu0 0.0
          %1627 = vmatmul.mubr.f32.gmra.mxu0 %v1390
          %v1628 = vpop.f32.mrf.mxu0
          %v1629 = vadd.f32 0.0, %v1628
          %v1630 = vpop.f32.mrf.mxu0
          %1631 = vdwg.mxu0
          %1632 = vmatprep.subr.mxu0 0.0
          %1633 = vmatpush1.msra.mxu0 %v1430
          %1634 = vmatprep.subr.mxu0 0.0
          %1635 = vmatpush1.msra.mxu0 %v1429
          %1636 = vmatprep.subr.mxu0 0.0
          %1637 = vmatpush1.msra.mxu0 %v1428
          %1638 = vmatprep.subr.mxu0 0.0
          %1639 = vmatpush1.msra.mxu0 %v1427
          %1640 = vmatprep.subr.mxu0 0.0
          %1641 = vmatpush1.msra.mxu0 %v1426
          %1642 = vmatprep.subr.mxu0 0.0
          %1643 = vmatpush1.msra.mxu0 %v1425
          %1644 = vmatprep.subr.mxu0 0.0
          %1645 = vmatpush1.msra.mxu0 %v1424
          %1646 = vmatprep.subr.mxu0 0.0
          %1647 = vmatpush1.msra.mxu0 %v1423
          %1648 = vmatprep.subr.mxu0 0.0
          %1649 = vmatpush1.msra.mxu0 %v1422
          %1650 = vmatprep.subr.mxu0 0.0
          %1651 = vmatpush1.msra.mxu0 %v1421
          %1652 = vmatprep.subr.mxu0 0.0
          %1653 = vmatpush1.msra.mxu0 %v1420
          %1654 = vmatprep.subr.mxu0 0.0
          %1655 = vmatpush1.msra.mxu0 %v1419
          %1656 = vmatprep.subr.mxu0 0.0
          %1657 = vmatpush1.msra.mxu0 %v1418
          %1658 = vmatprep.subr.mxu0 0.0
          %1659 = vmatpush1.msra.mxu0 %v1417
          %1660 = vmatprep.subr.mxu0 0.0
          %1661 = vmatpush1.msra.mxu0 %v1416
          %1662 = vmatprep.subr.mxu0 0.0
          %1663 = vmatpush1.msra.mxu0 %v1415
          %1664 = vmatprep.subr.mxu0 0.0
          %1665 = vmatpush2.msra.mxu0 0.0
          %1666 = vmatprep.subr.mxu0 0.0
          %1667 = vmatpush2.msra.mxu0 0.0
          %1668 = vmatprep.subr.mxu0 0.0
          %1669 = vmatpush2.msra.mxu0 0.0
          %1670 = vmatprep.subr.mxu0 0.0
          %1671 = vmatpush2.msra.mxu0 0.0
          %1672 = vmatprep.subr.mxu0 0.0
          %1673 = vmatpush2.msra.mxu0 0.0
          %1674 = vmatprep.subr.mxu0 0.0
          %1675 = vmatpush2.msra.mxu0 0.0
          %1676 = vmatprep.subr.mxu0 0.0
          %1677 = vmatpush2.msra.mxu0 0.0
          %1678 = vmatprep.subr.mxu0 0.0
          %1679 = vmatpush2.msra.mxu0 0.0
          %1680 = vmatprep.subr.mxu0 0.0
          %1681 = vmatpush2.msra.mxu0 0.0
          %1682 = vmatprep.subr.mxu0 0.0
          %1683 = vmatpush2.msra.mxu0 0.0
          %1684 = vmatprep.subr.mxu0 0.0
          %1685 = vmatpush2.msra.mxu0 0.0
          %1686 = vmatprep.subr.mxu0 0.0
          %1687 = vmatpush2.msra.mxu0 0.0
          %1688 = vmatprep.subr.mxu0 0.0
          %1689 = vmatpush2.msra.mxu0 0.0
          %1690 = vmatprep.subr.mxu0 0.0
          %1691 = vmatpush2.msra.mxu0 0.0
          %1692 = vmatprep.subr.mxu0 0.0
          %1693 = vmatpush2.msra.mxu0 0.0
          %1694 = vmatprep.subr.mxu0 0.0
          %1695 = vmatpush2.msra.mxu0 0.0
          %1696 = vmatprep.mubr.f32.mxu0 0.0
          %1697 = vmatmul.mubr.f32.gmra.mxu0 %v1391
          %v1698 = vpop.f32.mrf.mxu0
          %v1699 = vadd.f32 %v1514, %v1698
          %v1700 = vpop.f32.mrf.mxu0
          %1701 = vmatprep.mubr.f32.mxu0 0.0
          %1702 = vmatmul.mubr.f32.gmra.mxu0 %v1392
          %v1703 = vpop.f32.mrf.mxu0
          %v1704 = vadd.f32 %v1519, %v1703
          %v1705 = vpop.f32.mrf.mxu0
          %1706 = vmatprep.mubr.f32.mxu0 0.0
          %1707 = vmatmul.mubr.f32.gmra.mxu0 %v1393
          %v1708 = vpop.f32.mrf.mxu0
          %v1709 = vadd.f32 %v1524, %v1708
          %v1710 = vpop.f32.mrf.mxu0
          %1711 = vmatprep.mubr.f32.mxu0 0.0
          %1712 = vmatmul.mubr.f32.gmra.mxu0 %v1394
          %v1713 = vpop.f32.mrf.mxu0
          %v1714 = vadd.f32 %v1529, %v1713
          %v1715 = vpop.f32.mrf.mxu0
          %1716 = vmatprep.mubr.f32.mxu0 0.0
          %1717 = vmatmul.mubr.f32.gmra.mxu0 %v1395
          %v1718 = vpop.f32.mrf.mxu0
          %v1719 = vadd.f32 %v1534, %v1718
          %v1720 = vpop.f32.mrf.mxu0
          %1721 = vmatprep.mubr.f32.mxu0 0.0
          %1722 = vmatmul.mubr.f32.gmra.mxu0 %v1396
          %v1723 = vpop.f32.mrf.mxu0
          %v1724 = vadd.f32 %v1539, %v1723
          %v1725 = vpop.f32.mrf.mxu0
          %1726 = vmatprep.mubr.f32.mxu0 0.0
          %1727 = vmatmul.mubr.f32.gmra.mxu0 %v1397
          %v1728 = vpop.f32.mrf.mxu0
          %v1729 = vadd.f32 %v1544, %v1728
          %v1730 = vpop.f32.mrf.mxu0
          %1731 = vmatprep.mubr.f32.mxu0 0.0
          %1732 = vmatmul.mubr.f32.gmra.mxu0 %v1398
          %v1733 = vpop.f32.mrf.mxu0
          %v1734 = vadd.f32 %v1549, %v1733
          %v1735 = vpop.f32.mrf.mxu0
          %1736 = vmatprep.mubr.f32.mxu0 0.0
          %1737 = vmatmul.mubr.f32.gmra.mxu0 %v1399
          %v1738 = vpop.f32.mrf.mxu0
          %v1739 = vadd.f32 %v1554, %v1738
          %v1740 = vpop.f32.mrf.mxu0
          %1741 = vmatprep.mubr.f32.mxu0 0.0
          %1742 = vmatmul.mubr.f32.gmra.mxu0 %v1400
          %v1743 = vpop.f32.mrf.mxu0
          %v1744 = vadd.f32 %v1559, %v1743
          %v1745 = vpop.f32.mrf.mxu0
          %1746 = vmatprep.mubr.f32.mxu0 0.0
          %1747 = vmatmul.mubr.f32.gmra.mxu0 %v1401
          %v1748 = vpop.f32.mrf.mxu0
          %v1749 = vadd.f32 %v1564, %v1748
          %v1750 = vpop.f32.mrf.mxu0
          %1751 = vmatprep.mubr.f32.mxu0 0.0
          %1752 = vmatmul.mubr.f32.gmra.mxu0 %v1402
          %v1753 = vpop.f32.mrf.mxu0
          %v1754 = vadd.f32 %v1569, %v1753
          %v1755 = vpop.f32.mrf.mxu0
          %1756 = vmatprep.mubr.f32.mxu0 0.0
          %1757 = vmatmul.mubr.f32.gmra.mxu0 %v1403
          %v1758 = vpop.f32.mrf.mxu0
          %v1759 = vadd.f32 %v1574, %v1758
          %v1760 = vpop.f32.mrf.mxu0
          %1761 = vmatprep.mubr.f32.mxu0 0.0
          %1762 = vmatmul.mubr.f32.gmra.mxu0 %v1404
          %v1763 = vpop.f32.mrf.mxu0
          %v1764 = vadd.f32 %v1579, %v1763
          %v1765 = vpop.f32.mrf.mxu0
          %1766 = vmatprep.mubr.f32.mxu0 0.0
          %1767 = vmatmul.mubr.f32.gmra.mxu0 %v1405
          %v1768 = vpop.f32.mrf.mxu0
          %v1769 = vadd.f32 %v1584, %v1768
          %v1770 = vpop.f32.mrf.mxu0
          %1771 = vmatprep.mubr.f32.mxu0 0.0
          %1772 = vmatmul.mubr.f32.gmra.mxu0 %v1406
          %v1773 = vpop.f32.mrf.mxu0
          %v1774 = vadd.f32 %v1589, %v1773
          %v1775 = vpop.f32.mrf.mxu0
          %1776 = vmatprep.mubr.f32.mxu0 0.0
          %1777 = vmatmul.mubr.f32.gmra.mxu0 %v1407
          %v1778 = vpop.f32.mrf.mxu0
          %v1779 = vadd.f32 %v1594, %v1778
          %v1780 = vpop.f32.mrf.mxu0
          %1781 = vmatprep.mubr.f32.mxu0 0.0
          %1782 = vmatmul.mubr.f32.gmra.mxu0 %v1408
          %v1783 = vpop.f32.mrf.mxu0
          %v1784 = vadd.f32 %v1599, %v1783
          %v1785 = vpop.f32.mrf.mxu0
          %1786 = vmatprep.mubr.f32.mxu0 0.0
          %1787 = vmatmul.mubr.f32.gmra.mxu0 %v1409
          %v1788 = vpop.f32.mrf.mxu0
          %v1789 = vadd.f32 %v1604, %v1788
          %v1790 = vpop.f32.mrf.mxu0
          %1791 = vmatprep.mubr.f32.mxu0 0.0
          %1792 = vmatmul.mubr.f32.gmra.mxu0 %v1410
          %v1793 = vpop.f32.mrf.mxu0
          %v1794 = vadd.f32 %v1609, %v1793
          %v1795 = vpop.f32.mrf.mxu0
          %1796 = vmatprep.mubr.f32.mxu0 0.0
          %1797 = vmatmul.mubr.f32.gmra.mxu0 %v1411
          %v1798 = vpop.f32.mrf.mxu0
          %v1799 = vadd.f32 %v1614, %v1798
          %v1800 = vpop.f32.mrf.mxu0
          %1801 = vmatprep.mubr.f32.mxu0 0.0
          %1802 = vmatmul.mubr.f32.gmra.mxu0 %v1412
          %v1803 = vpop.f32.mrf.mxu0
          %v1804 = vadd.f32 %v1619, %v1803
          %v1805 = vpop.f32.mrf.mxu0
          %1806 = vmatprep.mubr.f32.mxu0 0.0
          %1807 = vmatmul.mubr.f32.gmra.mxu0 %v1413
          %v1808 = vpop.f32.mrf.mxu0
          %v1809 = vadd.f32 %v1624, %v1808
          %v1810 = vpop.f32.mrf.mxu0
          %1811 = vmatprep.mubr.f32.mxu0 0.0
          %1812 = vmatmul.mubr.f32.gmra.mxu0 %v1414
          %v1813 = vpop.f32.mrf.mxu0
          %v1814 = vadd.f32 %v1629, %v1813
          %v1815 = vpop.f32.mrf.mxu0
          %1816 = vdwg.mxu0
          %v1817 = vld [vmem:[%s5] sm:$0x1]
          %v1819 = vlaneseq
          %v1820 = vshrl.u32 %v1819, 7
          %v1821 = vsub.s32 0, %v1820
          %v1822 = vrot.slane %v1817, %v1821
          %v1824 = vadd.f32 %v1699, %v1822
          %v1825 = vadd.f32 %v1704, %v1822
          %v1826 = vadd.f32 %v1709, %v1822
          %v1827 = vadd.f32 %v1714, %v1822
          %v1828 = vadd.f32 %v1719, %v1822
          %v1829 = vadd.f32 %v1724, %v1822
          %v1830 = vadd.f32 %v1729, %v1822
          %v1831 = vadd.f32 %v1734, %v1822
          %v1832 = vadd.f32 %v1739, %v1822
          %v1833 = vadd.f32 %v1744, %v1822
          %v1834 = vadd.f32 %v1749, %v1822
          %v1835 = vadd.f32 %v1754, %v1822
          %v1836 = vadd.f32 %v1759, %v1822
          %v1837 = vadd.f32 %v1764, %v1822
          %v1838 = vadd.f32 %v1769, %v1822
          %v1839 = vadd.f32 %v1774, %v1822
          %v1840 = vadd.f32 %v1779, %v1822
          %v1841 = vadd.f32 %v1784, %v1822
          %v1842 = vadd.f32 %v1789, %v1822
          %v1843 = vadd.f32 %v1794, %v1822
          %v1844 = vadd.f32 %v1799, %v1822
          %v1845 = vadd.f32 %v1804, %v1822
          %v1846 = vadd.f32 %v1809, %v1822
          %v1847 = vadd.f32 %v1814, %v1822
          %1848 = vst [vmem:[%s375] sm:$0xff] %v1824
          %1849 = vst [vmem:[%s375 + $0x8] sm:$0xff] %v1825
          %1850 = vst [vmem:[%s375 + $0x10] sm:$0xff] %v1826
          %1851 = vst [vmem:[%s375 + $0x18] sm:$0xff] %v1827
          %1852 = vst [vmem:[%s375 + $0x20] sm:$0xff] %v1828
          %1853 = vst [vmem:[%s375 + $0x28] sm:$0xff] %v1829
          %1854 = vst [vmem:[%s375 + $0x30] sm:$0xff] %v1830
          %1855 = vst [vmem:[%s375 + $0x38] sm:$0xff] %v1831
          %1856 = vst [vmem:[%s375 + $0x40] sm:$0xff] %v1832
          %1857 = vst [vmem:[%s375 + $0x48] sm:$0xff] %v1833
          %1858 = vst [vmem:[%s375 + $0x50] sm:$0xff] %v1834
          %1859 = vst [vmem:[%s375 + $0x58] sm:$0xff] %v1835
          %1860 = vst [vmem:[%s375 + $0x60] sm:$0xff] %v1836
          %1861 = vst [vmem:[%s375 + $0x68] sm:$0xff] %v1837
          %1862 = vst [vmem:[%s375 + $0x70] sm:$0xff] %v1838
          %1863 = vst [vmem:[%s375 + $0x78] sm:$0xff] %v1839
          %1864 = vst [vmem:[%s375 + $0x80] sm:$0xff] %v1840
          %1865 = vst [vmem:[%s375 + $0x88] sm:$0xff] %v1841
          %1866 = vst [vmem:[%s375 + $0x90] sm:$0xff] %v1842
          %1867 = vst [vmem:[%s375 + $0x98] sm:$0xff] %v1843
          %1868 = vst [vmem:[%s375 + $0xa0] sm:$0xff] %v1844
          %1869 = vst [vmem:[%s375 + $0xa8] sm:$0xff] %v1845
          %1870 = vst [vmem:[%s375 + $0xb0] sm:$0xff] %v1846
          %1871 = vst [vmem:[%s375 + $0xb8] sm:$0xff] %v1847
        $region72: #{tpu_custom_call.1} parent=43 // pred_fallthru
          _
        %s1872 = sand.u32 %s188, 1
        %s1873 = scalar_lea.sflag [#allocation5], %s1872
        %s1874 = sand.u32 %s188, 1
        %s1875 = smul.addr %s1874, 192
        %s1876 = scalar_lea.vmem [#allocation12], %s1875
        // Predicated region
        $region73: #{tpu_custom_call.1} parent=43 // pred_check
          %p1877 = pneg %p198
        $region74: #{tpu_custom_call.1} parent=43 // pred_check_branch
          %1879 = sbr.rel (%p1877) target = $region76
        $region75: #{tpu_custom_call.1} parent=43 // pred_region
          %s1880 = smul.u32 24, %s29
          %s1882 = ssub.s32 3072, 3072
          %1883 = vsyncadd %s1873, %s1882
          %s1884 = smul.addr %s1880, 128
          %s1885 = scalar_lea.hbm %s6, %s1884
          %s1886 = sshll.u32 %s1876, 4
          %s1887 = int_to_ptr.vmem [resolvable:$true] %s1886
          %1892 = dma.vmem_to_hbm [thread:$0]  %s1887, 3072, %s1885, %s1873, 128, 128, 8
        $region76: #{tpu_custom_call.1} parent=43 // pred_fallthru
          _
      $region44: #{tpu_custom_call.1} parent=5 // pred_fallthru
        _
      %p1893 = scmp.le.s32.totalorder 2, %s20
      // Predicated region
      $region77: #{tpu_custom_call.1} parent=5 // pred_check
        %p1894 = pneg %p1893
      $region78: #{tpu_custom_call.1} parent=5 // pred_check_branch
        %1896 = sbr.rel (%p1894) target = $region80
      $region79: #{tpu_custom_call.1} parent=5 // pred_region
        %s1897 = ssub.s32 %s20, 2
        // Predicated region
        $region81: #{tpu_custom_call.1} parent=79 // pred_check
          %p1898 = pneg %p204
        $region82: #{tpu_custom_call.1} parent=79 // pred_check_branch
          %1900 = sbr.rel (%p1898) target = $region84
        $region83: #{tpu_custom_call.1} parent=79 // pred_region
          %s1901 = sand.u32 %s189, 1
          %s1902 = scalar_lea.sflag [#allocation5], %s1901
          %s1903 = sand.u32 %s189, 1
          %s1904 = smul.addr %s1903, 192
          %s1905 = scalar_lea.vmem [#allocation12], %s1904
          %1906 = dma.done %s1902, 3072
        $region84: #{tpu_custom_call.1} parent=79 // pred_fallthru
          _
      $region80: #{tpu_custom_call.1} parent=5 // pred_fallthru
        _
    $region6: #{tpu_custom_call.1} parent=1 // loop_footer
      %s24 = sadd.s32 1, %s20
    $region7: #{tpu_custom_call.1} parent=1 // loop_footer_branch
      %19 = sbr.rel target = $region3
    $region8: #{tpu_custom_call.1} parent=1 // loop_exit
      _
    %1907 = vsyncpa [#allocation4], 1
    %s1908 = scalar_lea.sflag [#allocation4], 1
    %1909 = vsyncpa %s1908, 1
    %1910 = vsyncpa [#allocation7], 1
    %1911 = vsyncpa [#allocation11], 1
    %1912 = vsyncpa [#allocation5], 1
    %s1913 = scalar_lea.sflag [#allocation5], 1
    %1914 = vsyncpa %s1913, 1

</llo_original>
